<compile_context>
chip_gen: v5e
topology: v5e:2x2
jax: 0.10.0
libtpu: 0.0.40
codegen_flags: <defaults>
</compile_context>

<pallas_src>
import functools

import jax
import jax.numpy as jnp
from jax.experimental import pallas as pl
from jax.experimental.pallas import tpu as pltpu


def _conv_out(size, k, s, p):
    return (size + 2 * p - k) // s + 1


def _discriminator_kernel(p_ref, w1_ref, b1_ref, w2_ref, b2_ref, o_ref, hpad_ref,
                          *, B, kh, kw, Ho1, Wo1, Ho2, Wo2, neg_slope):
    K, C1 = w1_ref.shape

    # ---------------- conv1: one MXU GEMM over all B images ------------------
    # p_ref block: (B, Ho1*Wo1, K) bf16, host-side im2col with Cin padded to 8
    # so K = kh*kw*8 = 128 (lane / MXU-K aligned).  Leading-dim collapse is a
    # layout no-op since Ho1*Wo1 is sublane-tile aligned here.
    lhs = p_ref[...].reshape(B * Ho1 * Wo1, K)
    acc1 = jnp.dot(lhs, w1_ref[...], preferred_element_type=jnp.float32)
    acc1 = acc1 + b1_ref[...]                              # (B*Ho1*Wo1, C1) + (1, C1)
    acc1 = jnp.where(acc1 > 0, acc1, neg_slope * acc1)     # LeakyReLU(0.2), f32
    h = acc1.reshape(B, Ho1, Wo1, C1)

    # ------- keep h in VMEM, zero-padded (pad=1) for the second conv ---------
    # Zeroed every step: megacore-safe (see header note); interior is then
    # fully overwritten with this step's activations.
    hpad_ref[...] = jnp.zeros_like(hpad_ref)
    hpad_ref[:, pl.ds(1, Ho1), pl.ds(1, Wo1), :] = h

    # ------- conv2 (Cout=1): VPU tap-wise MAC, ONE final lane reduction ------
    acc2 = jnp.zeros((B, Ho2, Wo2, C1), jnp.float32)
    for i in range(kh):
        for j in range(kw):
            win = hpad_ref[:, pl.ds(i, Ho2), pl.ds(j, Wo2), :]   # (B,Ho2,Wo2,C1)
            wt = w2_ref[pl.ds(i * kw + j, 1), :]                 # (1, C1)
            acc2 = acc2 + win * wt
    z = jnp.sum(acc2, axis=-1) + b2_ref[...]                     # (B,Ho2,Wo2) + (1,1)

    # sigmoid: EUP exp + approx reciprocal
    y = pl.reciprocal(1.0 + jnp.exp(-z), approx=True)
    # TODO(synk): a lane-dense flat (1, 1, B*Ho2*Wo2) output slab would avoid
    # 7-lane masked stores, but needs a non-tile-aligned in-kernel reshape;
    # writeback is tiny after batching, so keep the safe direct store.
    o_ref[...] = y[None].astype(o_ref.dtype)


def discriminator_forward(params, x, adv_noise=None, *, images_per_block=8):
    """Forward pass of the GAN Discriminator; returns a flat (N*Ho2*Wo2,) vector."""
    if adv_noise is not None:
        x = jnp.concatenate([x, adv_noise], axis=1)        # torch.cat(..., dim=1)

    w1, b1, w2, b2 = params["w1"], params["b1"], params["w2"], params["b2"]
    N, Cin, H, W = x.shape
    C1, Cin_w, kh, kw = w1.shape
    assert Cin == Cin_w, "input channels must match conv1 weight"
    stride, pad = 2, 1
    Ho1, Wo1 = _conv_out(H, kh, stride, pad), _conv_out(W, kw, stride, pad)
    Ho2, Wo2 = _conv_out(Ho1, kh, 1, pad), _conv_out(Wo1, kw, 1, pad)
    assert Ho1 >= 1 and Wo1 >= 1 and Ho2 >= 1 and Wo2 >= 1

    # Pad Cin up to a multiple of 8 (6 -> 8) so K = kh*kw*Cp = 128 here.
    Cp = max(8, ((Cin + 7) // 8) * 8)
    K = kh * kw * Cp

    # Batch B images per grid step; pad N up to a multiple of B (stripped below).
    B = max(1, min(images_per_block, N))
    num_blocks = pl.cdiv(N, B)
    Npad = num_blocks * B

    # ---- host-side layout prep + im2col (cheap; a few KB/image) -------------
    # NCHW -> NHWC, pad channels to Cp, zero-pad spatial, extract conv1 patches
    # in (tap-major, channel-minor) column order matching w1_2d below.
    xh = jnp.transpose(x, (0, 2, 3, 1)).astype(jnp.float32)
    xh = jnp.pad(xh, ((0, Npad - N), (pad, pad), (pad, pad), (0, Cp - Cin)))
    cols = []
    for i in range(kh):
        for j in range(kw):
            cols.append(xh[:, i:i + stride * (Ho1 - 1) + 1:stride,
                            j:j + stride * (Wo1 - 1) + 1:stride, :])
    patches = jnp.concatenate(cols, axis=-1)               # (Npad, Ho1, Wo1, K)
    patches = patches.reshape(Npad, Ho1 * Wo1, K).astype(jnp.bfloat16)

    # weights: (Cout, Cin, kh, kw) -> im2col row order ((i*kw + j)*Cp + c)
    w1_pad = jnp.pad(w1, ((0, 0), (0, Cp - Cin), (0, 0), (0, 0)))
    w1_2d = jnp.transpose(w1_pad, (2, 3, 1, 0)).reshape(K, C1).astype(jnp.bfloat16)
    b1_2d = b1.reshape(1, C1).astype(jnp.float32)
    w2_2d = jnp.transpose(w2[0], (1, 2, 0)).reshape(kh * kw, C1).astype(jnp.float32)
    b2_2d = b2.reshape(1, 1).astype(jnp.float32)

    kernel = functools.partial(
        _discriminator_kernel, B=B, kh=kh, kw=kw,
        Ho1=Ho1, Wo1=Wo1, Ho2=Ho2, Wo2=Wo2, neg_slope=0.2)

    # Per-step working set (patches block, weights, padded-h scratch, conv2
    # accumulator) is well under 1 MB at B=8, far below VMEM on all generations.
    out = pl.pallas_call(
        kernel,
        out_shape=jax.ShapeDtypeStruct((num_blocks, B, Ho2, Wo2), jnp.float32),
        grid=(num_blocks,),
        in_specs=[
            pl.BlockSpec((B, Ho1 * Wo1, K), lambda n: (n, 0, 0)),
            pl.BlockSpec((K, C1), lambda n: (0, 0)),
            pl.BlockSpec((1, C1), lambda n: (0, 0)),
            pl.BlockSpec((kh * kw, C1), lambda n: (0, 0)),
            pl.BlockSpec((1, 1), lambda n: (0, 0)),
        ],
        out_specs=pl.BlockSpec((1, B, Ho2, Wo2), lambda n: (n, 0, 0, 0)),
        scratch_shapes=[
            pltpu.VMEM((B, Ho1 + 2 * pad, Wo1 + 2 * pad, C1), jnp.float32)],
        compiler_params=pltpu.CompilerParams(dimension_semantics=("parallel",)),
    )(patches, w1_2d, b1_2d, w2_2d, b2_2d)

    # Strip padded images and flatten (matches .view(-1)).
    return out.reshape(Npad, Ho2 * Wo2)[:N].reshape(-1)


def init_discriminator_params(key):
    k1, k2, k3, k4 = jax.random.split(key, 4)
    # Conv2d(6, 64, kernel_size=4, stride=2, padding=1)
    w1 = jax.random.normal(k1, (64, 6, 4, 4), jnp.float32) * 0.05
    b1 = jax.random.normal(k2, (64,), jnp.float32) * 0.05
    # Conv2d(64, 1, kernel_size=4, stride=1, padding=1)
    w2 = jax.random.normal(k3, (1, 64, 4, 4), jnp.float32) * 0.05
    b2 = jax.random.normal(k4, (1,), jnp.float32) * 0.05
    return {"w1": w1, "b1": b1, "w2": w2, "b2": b2}


def _reference_forward(params, x, adv_noise=None):
    # Pure-JAX (XLA) reference for correctness checking.
    if adv_noise is not None:
        x = jnp.concatenate([x, adv_noise], axis=1)
    dn = ("NCHW", "OIHW", "NCHW")
    h = jax.lax.conv_general_dilated(x, params["w1"], (2, 2), ((1, 1), (1, 1)),
                                     dimension_numbers=dn)
    h = h + params["b1"].reshape(1, -1, 1, 1)
    h = jnp.where(h > 0, h, 0.2 * h)
    y = jax.lax.conv_general_dilated(h, params["w2"], (1, 1), ((1, 1), (1, 1)),
                                     dimension_numbers=dn)
    y = y + params["b2"].reshape(1, -1, 1, 1)
    return jax.nn.sigmoid(y).reshape(-1)


if __name__ == "__main__":
    key = jax.random.PRNGKey(0)
    kp, kx, kn = jax.random.split(key, 3)
    params = init_discriminator_params(kp)

    fwd = jax.jit(discriminator_forward)

    # Case 1: x has 3 channels, adv_noise has 3 -> concatenated 6 = conv1 in_channels.
    x = jax.random.normal(kx, (2, 3, 16, 16), jnp.float32)
    adv_noise = jax.random.normal(kn, (2, 3, 16, 16), jnp.float32)
    out = jax.block_until_ready(fwd(params, x, adv_noise))
    assert out.shape == (2 * 1 * 7 * 7,), out.shape
    ref = _reference_forward(params, x, adv_noise)
    err = float(jnp.max(jnp.abs(out - ref)))
    assert err < 5e-2, f"max abs error vs reference: {err}"

    # Case 2: no adv_noise (6-channel input), N not a multiple of B -> multi-block
    # grid + padded-image stripping path.
    x2 = jax.random.normal(kx, (10, 6, 16, 16), jnp.float32)
    out2 = jax.block_until_ready(fwd(params, x2, None))
    assert out2.shape == (10 * 1 * 7 * 7,), out2.shape
    ref2 = _reference_forward(params, x2, None)
    err2 = float(jnp.max(jnp.abs(out2 - ref2)))
    assert err2 < 5e-2, f"max abs error vs reference (case 2): {err2}"

    print("KERNEL_OK")
</pallas_src>

<mosaic_0001>
module attributes {stable_mosaic.version = 11 : i64} {
  func.func @_discriminator_kernel(%arg0: i32, %arg1: memref<2x64x128xbf16, #tpu.memory_space<vmem>>, %arg2: memref<128x64xbf16, #tpu.memory_space<vmem>>, %arg3: memref<1x64xf32, #tpu.memory_space<vmem>>, %arg4: memref<16x64xf32, #tpu.memory_space<vmem>>, %arg5: memref<1x1xf32, #tpu.memory_space<vmem>>, %arg6: memref<1x2x7x7xf32, #tpu.memory_space<vmem>>, %arg7: memref<2x10x10x64xf32, #tpu.memory_space<vmem>>) attributes {dimension_semantics = [#tpu.dimension_semantics<parallel>], iteration_bounds = array<i64: 1>, scalar_prefetch = 0 : i64, scratch_operands = 1 : i64, tpu.core_type = #tpu.core_type<tc>, window_params = [{transform_indices = @transform_0, window_bounds = array<i64: 2, 64, 128>}, {pipeline_mode = #tpu.pipeline_mode<synchronous>, transform_indices = @transform_1, window_bounds = array<i64: 128, 64>}, {pipeline_mode = #tpu.pipeline_mode<synchronous>, transform_indices = @transform_2, window_bounds = array<i64: 1, 64>}, {pipeline_mode = #tpu.pipeline_mode<synchronous>, transform_indices = @transform_3, window_bounds = array<i64: 16, 64>}, {pipeline_mode = #tpu.pipeline_mode<synchronous>, transform_indices = @transform_4, window_bounds = array<i64: 1, 1>}, {transform_indices = @transform_5, window_bounds = array<i64: 1, 2, 7, 7>}]} {
    %c0 = arith.constant 0 : index
    %c0_0 = arith.constant 0 : index
    %c0_1 = arith.constant 0 : index
    %0 = vector.load %arg1[%c0, %c0_0, %c0_1] : memref<2x64x128xbf16, #tpu.memory_space<vmem>>, vector<2x64x128xbf16>
    %1 = vector.shape_cast %0 : vector<2x64x128xbf16> to vector<128x128xbf16>
    %c0_2 = arith.constant 0 : index
    %c0_3 = arith.constant 0 : index
    %2 = vector.load %arg2[%c0_2, %c0_3] : memref<128x64xbf16, #tpu.memory_space<vmem>>, vector<128x64xbf16>
    %cst = arith.constant dense<0.000000e+00> : vector<128x64xf32>
    %3 = tpu.matmul %1, %2, %cst {dimension_numbers = #tpu.dot_dimension_numbers<[1], [0], [0], [1], [0, 0, 1, 1], [], []>} : vector<128x128xbf16>, vector<128x64xbf16>, vector<128x64xf32> -> vector<128x64xf32>
    %c0_4 = arith.constant 0 : index
    %c0_5 = arith.constant 0 : index
    %4 = vector.load %arg3[%c0_4, %c0_5] : memref<1x64xf32, #tpu.memory_space<vmem>>, vector<1x64xf32>
    %5 = vector.broadcast %4 : vector<1x64xf32> to vector<128x64xf32>
    %6 = arith.addf %3, %5 : vector<128x64xf32>
    %cst_6 = arith.constant 0.000000e+00 : f32
    %7 = vector.broadcast %cst_6 : f32 to vector<128x64xf32>
    %8 = arith.cmpf ogt, %6, %7 : vector<128x64xf32>
    %cst_7 = arith.constant 2.000000e-01 : f32
    %9 = vector.broadcast %cst_7 : f32 to vector<128x64xf32>
    %10 = arith.mulf %9, %6 : vector<128x64xf32>
    %11 = arith.select %8, %6, %10 : vector<128x64xi1>, vector<128x64xf32>
    %12 = vector.shape_cast %11 : vector<128x64xf32> to vector<2x8x8x64xf32>
    %cst_8 = arith.constant 0.000000e+00 : f32
    %13 = vector.broadcast %cst_8 : f32 to vector<2x10x10x64xf32>
    %c0_9 = arith.constant 0 : index
    %c0_10 = arith.constant 0 : index
    %c0_11 = arith.constant 0 : index
    %c0_12 = arith.constant 0 : index
    %14 = vector.load %arg7[%c0_9, %c0_10, %c0_11, %c0_12] : memref<2x10x10x64xf32, #tpu.memory_space<vmem>>, vector<2x10x10x64xf32>
    tpu.vector_store %arg7[%c0_9, %c0_10, %c0_11, %c0_12], %13 {strides = array<i32>} : memref<2x10x10x64xf32, #tpu.memory_space<vmem>>, vector<2x10x10x64xf32>,
    %c0_13 = arith.constant 0 : index
    %c1 = arith.constant 1 : index
    %c1_14 = arith.constant 1 : index
    %c0_15 = arith.constant 0 : index
    %15 = vector.load %arg7[%c0_13, %c1, %c1_14, %c0_15] : memref<2x10x10x64xf32, #tpu.memory_space<vmem>>, vector<2x8x8x64xf32>
    tpu.vector_store %arg7[%c0_13, %c1, %c1_14, %c0_15], %12 {strides = array<i32>} : memref<2x10x10x64xf32, #tpu.memory_space<vmem>>, vector<2x8x8x64xf32>,
    %cst_16 = arith.constant 0.000000e+00 : f32
    %16 = vector.broadcast %cst_16 : f32 to vector<2x7x7x64xf32>
    %c0_17 = arith.constant 0 : index
    %c0_18 = arith.constant 0 : index
    %c0_19 = arith.constant 0 : index
    %c0_20 = arith.constant 0 : index
    %17 = vector.load %arg7[%c0_17, %c0_18, %c0_19, %c0_20] : memref<2x10x10x64xf32, #tpu.memory_space<vmem>>, vector<2x7x7x64xf32>
    %c0_21 = arith.constant 0 : index
    %c0_22 = arith.constant 0 : index
    %18 = vector.load %arg4[%c0_21, %c0_22] : memref<16x64xf32, #tpu.memory_space<vmem>>, vector<1x64xf32>
    %19 = vector.shape_cast %18 : vector<1x64xf32> to vector<1x1x1x64xf32>
    %20 = vector.broadcast %19 : vector<1x1x1x64xf32> to vector<2x7x7x64xf32>
    %21 = arith.mulf %17, %20 : vector<2x7x7x64xf32>
    %22 = arith.addf %16, %21 : vector<2x7x7x64xf32>
    %c0_23 = arith.constant 0 : index
    %c0_24 = arith.constant 0 : index
    %c1_25 = arith.constant 1 : index
    %c0_26 = arith.constant 0 : index
    %23 = vector.load %arg7[%c0_23, %c0_24, %c1_25, %c0_26] : memref<2x10x10x64xf32, #tpu.memory_space<vmem>>, vector<2x7x7x64xf32>
    %c1_27 = arith.constant 1 : index
    %c0_28 = arith.constant 0 : index
    %24 = vector.load %arg4[%c1_27, %c0_28] : memref<16x64xf32, #tpu.memory_space<vmem>>, vector<1x64xf32>
    %25 = vector.shape_cast %24 : vector<1x64xf32> to vector<1x1x1x64xf32>
    %26 = vector.broadcast %25 : vector<1x1x1x64xf32> to vector<2x7x7x64xf32>
    %27 = arith.mulf %23, %26 : vector<2x7x7x64xf32>
    %28 = arith.addf %22, %27 : vector<2x7x7x64xf32>
    %c0_29 = arith.constant 0 : index
    %c0_30 = arith.constant 0 : index
    %c2 = arith.constant 2 : index
    %c0_31 = arith.constant 0 : index
    %29 = vector.load %arg7[%c0_29, %c0_30, %c2, %c0_31] : memref<2x10x10x64xf32, #tpu.memory_space<vmem>>, vector<2x7x7x64xf32>
    %c2_32 = arith.constant 2 : index
    %c0_33 = arith.constant 0 : index
    %30 = vector.load %arg4[%c2_32, %c0_33] : memref<16x64xf32, #tpu.memory_space<vmem>>, vector<1x64xf32>
    %31 = vector.shape_cast %30 : vector<1x64xf32> to vector<1x1x1x64xf32>
    %32 = vector.broadcast %31 : vector<1x1x1x64xf32> to vector<2x7x7x64xf32>
    %33 = arith.mulf %29, %32 : vector<2x7x7x64xf32>
    %34 = arith.addf %28, %33 : vector<2x7x7x64xf32>
    %c0_34 = arith.constant 0 : index
    %c0_35 = arith.constant 0 : index
    %c3 = arith.constant 3 : index
    %c0_36 = arith.constant 0 : index
    %35 = vector.load %arg7[%c0_34, %c0_35, %c3, %c0_36] : memref<2x10x10x64xf32, #tpu.memory_space<vmem>>, vector<2x7x7x64xf32>
    %c3_37 = arith.constant 3 : index
    %c0_38 = arith.constant 0 : index
    %36 = vector.load %arg4[%c3_37, %c0_38] : memref<16x64xf32, #tpu.memory_space<vmem>>, vector<1x64xf32>
    %37 = vector.shape_cast %36 : vector<1x64xf32> to vector<1x1x1x64xf32>
    %38 = vector.broadcast %37 : vector<1x1x1x64xf32> to vector<2x7x7x64xf32>
    %39 = arith.mulf %35, %38 : vector<2x7x7x64xf32>
    %40 = arith.addf %34, %39 : vector<2x7x7x64xf32>
    %c0_39 = arith.constant 0 : index
    %c1_40 = arith.constant 1 : index
    %c0_41 = arith.constant 0 : index
    %c0_42 = arith.constant 0 : index
    %41 = vector.load %arg7[%c0_39, %c1_40, %c0_41, %c0_42] : memref<2x10x10x64xf32, #tpu.memory_space<vmem>>, vector<2x7x7x64xf32>
    %c4 = arith.constant 4 : index
    %c0_43 = arith.constant 0 : index
    %42 = vector.load %arg4[%c4, %c0_43] : memref<16x64xf32, #tpu.memory_space<vmem>>, vector<1x64xf32>
    %43 = vector.shape_cast %42 : vector<1x64xf32> to vector<1x1x1x64xf32>
    %44 = vector.broadcast %43 : vector<1x1x1x64xf32> to vector<2x7x7x64xf32>
    %45 = arith.mulf %41, %44 : vector<2x7x7x64xf32>
    %46 = arith.addf %40, %45 : vector<2x7x7x64xf32>
    %c0_44 = arith.constant 0 : index
    %c1_45 = arith.constant 1 : index
    %c1_46 = arith.constant 1 : index
    %c0_47 = arith.constant 0 : index
    %47 = vector.load %arg7[%c0_44, %c1_45, %c1_46, %c0_47] : memref<2x10x10x64xf32, #tpu.memory_space<vmem>>, vector<2x7x7x64xf32>
    %c5 = arith.constant 5 : index
    %c0_48 = arith.constant 0 : index
    %48 = vector.load %arg4[%c5, %c0_48] : memref<16x64xf32, #tpu.memory_space<vmem>>, vector<1x64xf32>
    %49 = vector.shape_cast %48 : vector<1x64xf32> to vector<1x1x1x64xf32>
    %50 = vector.broadcast %49 : vector<1x1x1x64xf32> to vector<2x7x7x64xf32>
    %51 = arith.mulf %47, %50 : vector<2x7x7x64xf32>
    %52 = arith.addf %46, %51 : vector<2x7x7x64xf32>
    %c0_49 = arith.constant 0 : index
    %c1_50 = arith.constant 1 : index
    %c2_51 = arith.constant 2 : index
    %c0_52 = arith.constant 0 : index
    %53 = vector.load %arg7[%c0_49, %c1_50, %c2_51, %c0_52] : memref<2x10x10x64xf32, #tpu.memory_space<vmem>>, vector<2x7x7x64xf32>
    %c6 = arith.constant 6 : index
    %c0_53 = arith.constant 0 : index
    %54 = vector.load %arg4[%c6, %c0_53] : memref<16x64xf32, #tpu.memory_space<vmem>>, vector<1x64xf32>
    %55 = vector.shape_cast %54 : vector<1x64xf32> to vector<1x1x1x64xf32>
    %56 = vector.broadcast %55 : vector<1x1x1x64xf32> to vector<2x7x7x64xf32>
    %57 = arith.mulf %53, %56 : vector<2x7x7x64xf32>
    %58 = arith.addf %52, %57 : vector<2x7x7x64xf32>
    %c0_54 = arith.constant 0 : index
    %c1_55 = arith.constant 1 : index
    %c3_56 = arith.constant 3 : index
    %c0_57 = arith.constant 0 : index
    %59 = vector.load %arg7[%c0_54, %c1_55, %c3_56, %c0_57] : memref<2x10x10x64xf32, #tpu.memory_space<vmem>>, vector<2x7x7x64xf32>
    %c7 = arith.constant 7 : index
    %c0_58 = arith.constant 0 : index
    %60 = vector.load %arg4[%c7, %c0_58] : memref<16x64xf32, #tpu.memory_space<vmem>>, vector<1x64xf32>
    %61 = vector.shape_cast %60 : vector<1x64xf32> to vector<1x1x1x64xf32>
    %62 = vector.broadcast %61 : vector<1x1x1x64xf32> to vector<2x7x7x64xf32>
    %63 = arith.mulf %59, %62 : vector<2x7x7x64xf32>
    %64 = arith.addf %58, %63 : vector<2x7x7x64xf32>
    %c0_59 = arith.constant 0 : index
    %c2_60 = arith.constant 2 : index
    %c0_61 = arith.constant 0 : index
    %c0_62 = arith.constant 0 : index
    %65 = vector.load %arg7[%c0_59, %c2_60, %c0_61, %c0_62] : memref<2x10x10x64xf32, #tpu.memory_space<vmem>>, vector<2x7x7x64xf32>
    %c8 = arith.constant 8 : index
    %c0_63 = arith.constant 0 : index
    %66 = vector.load %arg4[%c8, %c0_63] : memref<16x64xf32, #tpu.memory_space<vmem>>, vector<1x64xf32>
    %67 = vector.shape_cast %66 : vector<1x64xf32> to vector<1x1x1x64xf32>
    %68 = vector.broadcast %67 : vector<1x1x1x64xf32> to vector<2x7x7x64xf32>
    %69 = arith.mulf %65, %68 : vector<2x7x7x64xf32>
    %70 = arith.addf %64, %69 : vector<2x7x7x64xf32>
    %c0_64 = arith.constant 0 : index
    %c2_65 = arith.constant 2 : index
    %c1_66 = arith.constant 1 : index
    %c0_67 = arith.constant 0 : index
    %71 = vector.load %arg7[%c0_64, %c2_65, %c1_66, %c0_67] : memref<2x10x10x64xf32, #tpu.memory_space<vmem>>, vector<2x7x7x64xf32>
    %c9 = arith.constant 9 : index
    %c0_68 = arith.constant 0 : index
    %72 = vector.load %arg4[%c9, %c0_68] : memref<16x64xf32, #tpu.memory_space<vmem>>, vector<1x64xf32>
    %73 = vector.shape_cast %72 : vector<1x64xf32> to vector<1x1x1x64xf32>
    %74 = vector.broadcast %73 : vector<1x1x1x64xf32> to vector<2x7x7x64xf32>
    %75 = arith.mulf %71, %74 : vector<2x7x7x64xf32>
    %76 = arith.addf %70, %75 : vector<2x7x7x64xf32>
    %c0_69 = arith.constant 0 : index
    %c2_70 = arith.constant 2 : index
    %c2_71 = arith.constant 2 : index
    %c0_72 = arith.constant 0 : index
    %77 = vector.load %arg7[%c0_69, %c2_70, %c2_71, %c0_72] : memref<2x10x10x64xf32, #tpu.memory_space<vmem>>, vector<2x7x7x64xf32>
    %c10 = arith.constant 10 : index
    %c0_73 = arith.constant 0 : index
    %78 = vector.load %arg4[%c10, %c0_73] : memref<16x64xf32, #tpu.memory_space<vmem>>, vector<1x64xf32>
    %79 = vector.shape_cast %78 : vector<1x64xf32> to vector<1x1x1x64xf32>
    %80 = vector.broadcast %79 : vector<1x1x1x64xf32> to vector<2x7x7x64xf32>
    %81 = arith.mulf %77, %80 : vector<2x7x7x64xf32>
    %82 = arith.addf %76, %81 : vector<2x7x7x64xf32>
    %c0_74 = arith.constant 0 : index
    %c2_75 = arith.constant 2 : index
    %c3_76 = arith.constant 3 : index
    %c0_77 = arith.constant 0 : index
    %83 = vector.load %arg7[%c0_74, %c2_75, %c3_76, %c0_77] : memref<2x10x10x64xf32, #tpu.memory_space<vmem>>, vector<2x7x7x64xf32>
    %c11 = arith.constant 11 : index
    %c0_78 = arith.constant 0 : index
    %84 = vector.load %arg4[%c11, %c0_78] : memref<16x64xf32, #tpu.memory_space<vmem>>, vector<1x64xf32>
    %85 = vector.shape_cast %84 : vector<1x64xf32> to vector<1x1x1x64xf32>
    %86 = vector.broadcast %85 : vector<1x1x1x64xf32> to vector<2x7x7x64xf32>
    %87 = arith.mulf %83, %86 : vector<2x7x7x64xf32>
    %88 = arith.addf %82, %87 : vector<2x7x7x64xf32>
    %c0_79 = arith.constant 0 : index
    %c3_80 = arith.constant 3 : index
    %c0_81 = arith.constant 0 : index
    %c0_82 = arith.constant 0 : index
    %89 = vector.load %arg7[%c0_79, %c3_80, %c0_81, %c0_82] : memref<2x10x10x64xf32, #tpu.memory_space<vmem>>, vector<2x7x7x64xf32>
    %c12 = arith.constant 12 : index
    %c0_83 = arith.constant 0 : index
    %90 = vector.load %arg4[%c12, %c0_83] : memref<16x64xf32, #tpu.memory_space<vmem>>, vector<1x64xf32>
    %91 = vector.shape_cast %90 : vector<1x64xf32> to vector<1x1x1x64xf32>
    %92 = vector.broadcast %91 : vector<1x1x1x64xf32> to vector<2x7x7x64xf32>
    %93 = arith.mulf %89, %92 : vector<2x7x7x64xf32>
    %94 = arith.addf %88, %93 : vector<2x7x7x64xf32>
    %c0_84 = arith.constant 0 : index
    %c3_85 = arith.constant 3 : index
    %c1_86 = arith.constant 1 : index
    %c0_87 = arith.constant 0 : index
    %95 = vector.load %arg7[%c0_84, %c3_85, %c1_86, %c0_87] : memref<2x10x10x64xf32, #tpu.memory_space<vmem>>, vector<2x7x7x64xf32>
    %c13 = arith.constant 13 : index
    %c0_88 = arith.constant 0 : index
    %96 = vector.load %arg4[%c13, %c0_88] : memref<16x64xf32, #tpu.memory_space<vmem>>, vector<1x64xf32>
    %97 = vector.shape_cast %96 : vector<1x64xf32> to vector<1x1x1x64xf32>
    %98 = vector.broadcast %97 : vector<1x1x1x64xf32> to vector<2x7x7x64xf32>
    %99 = arith.mulf %95, %98 : vector<2x7x7x64xf32>
    %100 = arith.addf %94, %99 : vector<2x7x7x64xf32>
    %c0_89 = arith.constant 0 : index
    %c3_90 = arith.constant 3 : index
    %c2_91 = arith.constant 2 : index
    %c0_92 = arith.constant 0 : index
    %101 = vector.load %arg7[%c0_89, %c3_90, %c2_91, %c0_92] : memref<2x10x10x64xf32, #tpu.memory_space<vmem>>, vector<2x7x7x64xf32>
    %c14 = arith.constant 14 : index
    %c0_93 = arith.constant 0 : index
    %102 = vector.load %arg4[%c14, %c0_93] : memref<16x64xf32, #tpu.memory_space<vmem>>, vector<1x64xf32>
    %103 = vector.shape_cast %102 : vector<1x64xf32> to vector<1x1x1x64xf32>
    %104 = vector.broadcast %103 : vector<1x1x1x64xf32> to vector<2x7x7x64xf32>
    %105 = arith.mulf %101, %104 : vector<2x7x7x64xf32>
    %106 = arith.addf %100, %105 : vector<2x7x7x64xf32>
    %c0_94 = arith.constant 0 : index
    %c3_95 = arith.constant 3 : index
    %c3_96 = arith.constant 3 : index
    %c0_97 = arith.constant 0 : index
    %107 = vector.load %arg7[%c0_94, %c3_95, %c3_96, %c0_97] : memref<2x10x10x64xf32, #tpu.memory_space<vmem>>, vector<2x7x7x64xf32>
    %c15 = arith.constant 15 : index
    %c0_98 = arith.constant 0 : index
    %108 = vector.load %arg4[%c15, %c0_98] : memref<16x64xf32, #tpu.memory_space<vmem>>, vector<1x64xf32>
    %109 = vector.shape_cast %108 : vector<1x64xf32> to vector<1x1x1x64xf32>
    %110 = vector.broadcast %109 : vector<1x1x1x64xf32> to vector<2x7x7x64xf32>
    %111 = arith.mulf %107, %110 : vector<2x7x7x64xf32>
    %112 = arith.addf %106, %111 : vector<2x7x7x64xf32>
    %cst_99 = arith.constant dense<0.000000e+00> : vector<2x7x7xf32>
    %113 = vector.multi_reduction <add>, %112, %cst_99 [3] : vector<2x7x7x64xf32> to vector<2x7x7xf32>
    %c0_100 = arith.constant 0 : index
    %c0_101 = arith.constant 0 : index
    %114 = vector.load %arg5[%c0_100, %c0_101] : memref<1x1xf32, #tpu.memory_space<vmem>>, vector<1x1xf32>
    %115 = vector.shape_cast %114 : vector<1x1xf32> to vector<1x1x1xf32>
    %116 = vector.broadcast %115 : vector<1x1x1xf32> to vector<2x7x7xf32>
    %117 = arith.addf %113, %116 : vector<2x7x7xf32>
    %cst_102 = arith.constant 0.000000e+00 : f32
    %118 = vector.broadcast %cst_102 : f32 to vector<2x7x7xf32>
    %119 = arith.subf %118, %117 : vector<2x7x7xf32>
    %120 = math.exp %119 : vector<2x7x7xf32>
    %cst_103 = arith.constant 1.000000e+00 : f32
    %121 = vector.broadcast %cst_103 : f32 to vector<2x7x7xf32>
    %122 = arith.addf %121, %120 : vector<2x7x7xf32>
    %123 = tpu.reciprocal %122 {approx = true} : vector<2x7x7xf32> -> vector<2x7x7xf32>
    %124 = vector.shape_cast %123 : vector<2x7x7xf32> to vector<1x2x7x7xf32>
    %c0_104 = arith.constant 0 : index
    %c0_105 = arith.constant 0 : index
    %c0_106 = arith.constant 0 : index
    %c0_107 = arith.constant 0 : index
    %125 = vector.load %arg6[%c0_104, %c0_105, %c0_106, %c0_107] : memref<1x2x7x7xf32, #tpu.memory_space<vmem>>, vector<1x2x7x7xf32>
    tpu.vector_store %arg6[%c0_104, %c0_105, %c0_106, %c0_107], %124 {strides = array<i32>} : memref<1x2x7x7xf32, #tpu.memory_space<vmem>>, vector<1x2x7x7xf32>,
    return
  }
  func.func @transform_0(%arg0: i32) -> (i32, i32, i32) {
    %c0_i32 = arith.constant 0 : i32
    %c0_i32_0 = arith.constant 0 : i32
    %c0_i32_1 = arith.constant 0 : i32
    return %arg0, %c0_i32, %c0_i32_0 : i32, i32, i32
  }
  func.func @transform_1(%arg0: i32) -> (i32, i32) {
    %c0_i32 = arith.constant 0 : i32
    %c0_i32_0 = arith.constant 0 : i32
    %c0_i32_1 = arith.constant 0 : i32
    return %c0_i32, %c0_i32_0 : i32, i32
  }
  func.func @transform_2(%arg0: i32) -> (i32, i32) {
    %c0_i32 = arith.constant 0 : i32
    %c0_i32_0 = arith.constant 0 : i32
    %c0_i32_1 = arith.constant 0 : i32
    return %c0_i32, %c0_i32_0 : i32, i32
  }
  func.func @transform_3(%arg0: i32) -> (i32, i32) {
    %c0_i32 = arith.constant 0 : i32
    %c0_i32_0 = arith.constant 0 : i32
    %c0_i32_1 = arith.constant 0 : i32
    return %c0_i32, %c0_i32_0 : i32, i32
  }
  func.func @transform_4(%arg0: i32) -> (i32, i32) {
    %c0_i32 = arith.constant 0 : i32
    %c0_i32_0 = arith.constant 0 : i32
    %c0_i32_1 = arith.constant 0 : i32
    return %c0_i32, %c0_i32_0 : i32, i32
  }
  func.func @transform_5(%arg0: i32) -> (i32, i32, i32, i32) {
    %c0_i32 = arith.constant 0 : i32
    %c0_i32_0 = arith.constant 0 : i32
    %c0_i32_1 = arith.constant 0 : i32
    %c0_i32_2 = arith.constant 0 : i32
    return %arg0, %c0_i32, %c0_i32_0, %c0_i32_1 : i32, i32, i32, i32
  }
}

</mosaic_0001>

<llo_original>
// kernel: discriminator_forward.1
$region0: #{discriminator_forward.1}
  #allocation0 [shape = 'u32[]', space=smem, size = 0x4, offset = 0x4, fixed_abs, tag = 'smem constant byte address 0x4 - core index']
  #allocation1 [shape = 'u32[72,128]{1,0:T(1,128)}', space=vmem, size = 0x9000, scoped, tag = 'internal scratch']
  #allocation2 [shape = 'f32[2,10,10,64]{3,2,1,0:T(8,128)}', space=vmem, size = 0x28000, scoped, tag = 'scratch operand']
  #allocation3 [shape = 'f32[1,1]{1,0:T(1,128)S(1)}', space=vmem, size = 0x200, scoped, tag = 'scoped memory for discriminator_forward.1']
  %s0 = inlined_call_operand.vmem [shape: bf16[2,64,128], index: 0, kind: input, shape index: {}]
  %s1 = inlined_call_operand.vmem [shape: bf16[128,64], index: 1, kind: input, shape index: {}]
  %s2 = inlined_call_operand.vmem [shape: f32[1,64], index: 2, kind: input, shape index: {}]
  %s3 = inlined_call_operand.vmem [shape: f32[16,64], index: 3, kind: input, shape index: {}]
  %s4 = inlined_call_operand.<no memory space> [shape: f32[1,1], index: 4, kind: input, shape index: {}]
  %s5 = inlined_call_operand.vmem [shape: f32[1,2,7,7], index: 5, kind: output, shape index: {}]
  %s6 = sld [smem:[#allocation0]]
  $region30: #{discriminator_forward.1} parent=0
    _
  %s8 = ssub.s32 1, %s6
  %s9 = scalar_select 0, %s8, %s6
  %v10 = vstv %s4
  %11 = vst [vmem:[#allocation3] sm:$0x1] %v10
  // Predicated region
  $region2: #{discriminator_forward.1} parent=0 // pred_check
    _
  $region3: #{discriminator_forward.1} parent=0 // pred_check_branch
    %13 = sbr.rel (0) target = $region5
  $region4: #{discriminator_forward.1} parent=0 // pred_region
    _
  $region5: #{discriminator_forward.1} parent=0 // pred_fallthru
    _
  // Predicated region
  $region6: #{discriminator_forward.1} parent=0 // pred_check
    _
  $region7: #{discriminator_forward.1} parent=0 // pred_check_branch
    %15 = sbr.rel (0) target = $region9
  $region8: #{discriminator_forward.1} parent=0 // pred_region
    _
  $region9: #{discriminator_forward.1} parent=0 // pred_fallthru
    _
  // Predicated region
  $region10: #{discriminator_forward.1} parent=0 // pred_check
    _
  $region11: #{discriminator_forward.1} parent=0 // pred_check_branch
    %17 = sbr.rel (0) target = $region13
  $region12: #{discriminator_forward.1} parent=0 // pred_region
    _
  $region13: #{discriminator_forward.1} parent=0 // pred_fallthru
    _
  // Predicated region
  $region14: #{discriminator_forward.1} parent=0 // pred_check
    _
  $region15: #{discriminator_forward.1} parent=0 // pred_check_branch
    %19 = sbr.rel (0) target = $region17
  $region16: #{discriminator_forward.1} parent=0 // pred_region
    _
  $region17: #{discriminator_forward.1} parent=0 // pred_fallthru
    _
  // Predicated region
  $region18: #{discriminator_forward.1} parent=0 // pred_check
    _
  $region19: #{discriminator_forward.1} parent=0 // pred_check_branch
    %21 = sbr.rel (0) target = $region21
  $region20: #{discriminator_forward.1} parent=0 // pred_region
    _
  $region21: #{discriminator_forward.1} parent=0 // pred_fallthru
    _
  %v22 = vld [vmem:[%s0] sm:$0xf]
  %v23 = vld [vmem:[%s0 + $0x4] sm:$0xf]
  %v24 = vld [vmem:[%s0 + $0x8] sm:$0xf]
  %v25 = vld [vmem:[%s0 + $0xc] sm:$0xf]
  %v26 = vld [vmem:[%s0 + $0x10] sm:$0xf]
  %v27 = vld [vmem:[%s0 + $0x14] sm:$0xf]
  %v28 = vld [vmem:[%s0 + $0x18] sm:$0xf]
  %v29 = vld [vmem:[%s0 + $0x1c] sm:$0xf]
  %v30 = vld [vmem:[%s0 + $0x20] sm:$0xf]
  %v31 = vld [vmem:[%s0 + $0x24] sm:$0xf]
  %v32 = vld [vmem:[%s0 + $0x28] sm:$0xf]
  %v33 = vld [vmem:[%s0 + $0x2c] sm:$0xf]
  %v34 = vld [vmem:[%s0 + $0x30] sm:$0xf]
  %v35 = vld [vmem:[%s0 + $0x34] sm:$0xf]
  %v36 = vld [vmem:[%s0 + $0x38] sm:$0xf]
  %v37 = vld [vmem:[%s0 + $0x3c] sm:$0xf]
  %v38 = vld [vmem:[%s1] sm:$0xf]
  %v39 = vld [vmem:[%s1 + $0x4] sm:$0xf]
  %v40 = vld [vmem:[%s1 + $0x8] sm:$0xf]
  %v41 = vld [vmem:[%s1 + $0xc] sm:$0xf]
  %v42 = vld [vmem:[%s1 + $0x10] sm:$0xf]
  %v43 = vld [vmem:[%s1 + $0x14] sm:$0xf]
  %v44 = vld [vmem:[%s1 + $0x18] sm:$0xf]
  %v45 = vld [vmem:[%s1 + $0x1c] sm:$0xf]
  %v46 = vld [vmem:[%s1 + $0x20] sm:$0xf]
  %v47 = vld [vmem:[%s1 + $0x24] sm:$0xf]
  %v48 = vld [vmem:[%s1 + $0x28] sm:$0xf]
  %v49 = vld [vmem:[%s1 + $0x2c] sm:$0xf]
  %v50 = vld [vmem:[%s1 + $0x30] sm:$0xf]
  %v51 = vld [vmem:[%s1 + $0x34] sm:$0xf]
  %v52 = vld [vmem:[%s1 + $0x38] sm:$0xf]
  %v53 = vld [vmem:[%s1 + $0x3c] sm:$0xf]
  %v54 = vld [vmem:[%s2] sm:$0x1]
  %v56 = vperm.slane %v54, 0
  %v74 = vunpack.c.l.b16 %v22
  %v75 = vunpack.c.l.b16 %v23
  %v76 = vunpack.c.l.b16 %v24
  %v77 = vunpack.c.l.b16 %v25
  %v78 = vunpack.c.l.b16 %v26
  %v79 = vunpack.c.l.b16 %v27
  %v80 = vunpack.c.l.b16 %v28
  %v81 = vunpack.c.l.b16 %v29
  %v82 = vunpack.c.l.b16 %v30
  %v83 = vunpack.c.l.b16 %v31
  %v84 = vunpack.c.l.b16 %v32
  %v85 = vunpack.c.l.b16 %v33
  %v86 = vunpack.c.l.b16 %v34
  %v87 = vunpack.c.l.b16 %v35
  %v88 = vunpack.c.l.b16 %v36
  %v89 = vunpack.c.l.b16 %v37
  %v90 = vpack.c.b16 %v75, %v74
  %v91 = vpack.c.b16 %v77, %v76
  %v92 = vpack.c.b16 %v79, %v78
  %v93 = vpack.c.b16 %v81, %v80
  %v94 = vpack.c.b16 %v83, %v82
  %v95 = vpack.c.b16 %v85, %v84
  %v96 = vpack.c.b16 %v87, %v86
  %v97 = vpack.c.b16 %v89, %v88
  %v122 = vunpack.c.l.b16 %v38
  %v123 = vunpack.c.l.b16 %v39
  %v124 = vunpack.c.l.b16 %v40
  %v125 = vunpack.c.l.b16 %v41
  %v126 = vunpack.c.l.b16 %v42
  %v127 = vunpack.c.l.b16 %v43
  %v128 = vunpack.c.l.b16 %v44
  %v129 = vunpack.c.l.b16 %v45
  %v130 = vunpack.c.l.b16 %v46
  %v131 = vunpack.c.l.b16 %v47
  %v132 = vunpack.c.l.b16 %v48
  %v133 = vunpack.c.l.b16 %v49
  %v134 = vunpack.c.l.b16 %v50
  %v135 = vunpack.c.l.b16 %v51
  %v136 = vunpack.c.l.b16 %v52
  %v137 = vunpack.c.l.b16 %v53
  %v138 = vpack.c.b16 %v123, %v122
  %v139 = vpack.c.b16 %v125, %v124
  %v140 = vpack.c.b16 %v127, %v126
  %v141 = vpack.c.b16 %v129, %v128
  %v142 = vpack.c.b16 %v131, %v130
  %v143 = vpack.c.b16 %v133, %v132
  %v144 = vpack.c.b16 %v135, %v134
  %v145 = vpack.c.b16 %v137, %v136
  %154 = vmatpush.bf16.msra.mxu0 %v145
  %155 = vmatpush.bf16.msra.mxu0 %v144
  %156 = vmatpush.bf16.msra.mxu0 %v143
  %157 = vmatpush.bf16.msra.mxu0 %v142
  %158 = vmatpush.bf16.msra.mxu0 %v141
  %159 = vmatpush.bf16.msra.mxu0 %v140
  %160 = vmatpush.bf16.msra.mxu0 %v139
  %161 = vmatpush.bf16.msra.mxu0 %v138
  %162 = vmatmul.bf16.gmra.mxu0 %v90
  %v163 = vpop.f32.mrf.mxu0
  %v164 = vadd.f32 %v56, %v163
  %v165 = vpop.f32.mrf.mxu0
  %v166 = vadd.f32 %v56, %v165
  %167 = vmatmul.bf16.gmra.mxu0 %v91
  %v168 = vpop.f32.mrf.mxu0
  %v169 = vadd.f32 %v56, %v168
  %v170 = vpop.f32.mrf.mxu0
  %v171 = vadd.f32 %v56, %v170
  %172 = vmatmul.bf16.gmra.mxu0 %v92
  %v173 = vpop.f32.mrf.mxu0
  %v174 = vadd.f32 %v56, %v173
  %v175 = vpop.f32.mrf.mxu0
  %v176 = vadd.f32 %v56, %v175
  %177 = vmatmul.bf16.gmra.mxu0 %v93
  %v178 = vpop.f32.mrf.mxu0
  %v179 = vadd.f32 %v56, %v178
  %v180 = vpop.f32.mrf.mxu0
  %v181 = vadd.f32 %v56, %v180
  %182 = vmatmul.bf16.gmra.mxu0 %v94
  %v183 = vpop.f32.mrf.mxu0
  %v184 = vadd.f32 %v56, %v183
  %v185 = vpop.f32.mrf.mxu0
  %v186 = vadd.f32 %v56, %v185
  %187 = vmatmul.bf16.gmra.mxu0 %v95
  %v188 = vpop.f32.mrf.mxu0
  %v189 = vadd.f32 %v56, %v188
  %v190 = vpop.f32.mrf.mxu0
  %v191 = vadd.f32 %v56, %v190
  %192 = vmatmul.bf16.gmra.mxu0 %v96
  %v193 = vpop.f32.mrf.mxu0
  %v194 = vadd.f32 %v56, %v193
  %v195 = vpop.f32.mrf.mxu0
  %v196 = vadd.f32 %v56, %v195
  %197 = vmatmul.bf16.gmra.mxu0 %v97
  %v198 = vpop.f32.mrf.mxu0
  %v199 = vadd.f32 %v56, %v198
  %v200 = vpop.f32.mrf.mxu0
  %v201 = vadd.f32 %v56, %v200
  %202 = vdwg.mxu0
  %vm203 = vcmp.gt.f32.partialorder %v164, 0.0
  %vm204 = vcmp.gt.f32.partialorder %v166, 0.0
  %vm205 = vcmp.gt.f32.partialorder %v169, 0.0
  %vm206 = vcmp.gt.f32.partialorder %v171, 0.0
  %vm207 = vcmp.gt.f32.partialorder %v174, 0.0
  %vm208 = vcmp.gt.f32.partialorder %v176, 0.0
  %vm209 = vcmp.gt.f32.partialorder %v179, 0.0
  %vm210 = vcmp.gt.f32.partialorder %v181, 0.0
  %vm211 = vcmp.gt.f32.partialorder %v184, 0.0
  %vm212 = vcmp.gt.f32.partialorder %v186, 0.0
  %vm213 = vcmp.gt.f32.partialorder %v189, 0.0
  %vm214 = vcmp.gt.f32.partialorder %v191, 0.0
  %vm215 = vcmp.gt.f32.partialorder %v194, 0.0
  %vm216 = vcmp.gt.f32.partialorder %v196, 0.0
  %vm217 = vcmp.gt.f32.partialorder %v199, 0.0
  %vm218 = vcmp.gt.f32.partialorder %v201, 0.0
  %v219 = vmul.f32 %v164, 0.2
  %v220 = vmul.f32 %v166, 0.2
  %v221 = vmul.f32 %v169, 0.2
  %v222 = vmul.f32 %v171, 0.2
  %v223 = vmul.f32 %v174, 0.2
  %v224 = vmul.f32 %v176, 0.2
  %v225 = vmul.f32 %v179, 0.2
  %v226 = vmul.f32 %v181, 0.2
  %v227 = vmul.f32 %v184, 0.2
  %v228 = vmul.f32 %v186, 0.2
  %v229 = vmul.f32 %v189, 0.2
  %v230 = vmul.f32 %v191, 0.2
  %v231 = vmul.f32 %v194, 0.2
  %v232 = vmul.f32 %v196, 0.2
  %v233 = vmul.f32 %v199, 0.2
  %v234 = vmul.f32 %v201, 0.2
  %v235 = vsel %vm203, %v164, %v219
  %v236 = vsel %vm204, %v166, %v220
  %v237 = vsel %vm205, %v169, %v221
  %v238 = vsel %vm206, %v171, %v222
  %v239 = vsel %vm207, %v174, %v223
  %v240 = vsel %vm208, %v176, %v224
  %v241 = vsel %vm209, %v179, %v225
  %v242 = vsel %vm210, %v181, %v226
  %v243 = vsel %vm211, %v184, %v227
  %v244 = vsel %vm212, %v186, %v228
  %v245 = vsel %vm213, %v189, %v229
  %v246 = vsel %vm214, %v191, %v230
  %v247 = vsel %vm215, %v194, %v231
  %v248 = vsel %vm216, %v196, %v232
  %v249 = vsel %vm217, %v199, %v233
  %v250 = vsel %vm218, %v201, %v234
  %vm251 = vcmask 523264
  %252 = vst.msk [vmem:[#allocation2] sm:$0xff] %vm251, 0.0
  %vm253 = vcmask 517120
  %254 = vst.msk [vmem:[#allocation2 + $0x8] sm:$0x3] %vm253, 0.0
  %255 = vst.msk [vmem:[#allocation2 + $0x10] sm:$0xff] %vm251, 0.0
  %256 = vst.msk [vmem:[#allocation2 + $0x18] sm:$0x3] %vm253, 0.0
  %257 = vst.msk [vmem:[#allocation2 + $0x20] sm:$0xff] %vm251, 0.0
  %258 = vst.msk [vmem:[#allocation2 + $0x28] sm:$0x3] %vm253, 0.0
  %259 = vst.msk [vmem:[#allocation2 + $0x30] sm:$0xff] %vm251, 0.0
  %260 = vst.msk [vmem:[#allocation2 + $0x38] sm:$0x3] %vm253, 0.0
  %261 = vst.msk [vmem:[#allocation2 + $0x40] sm:$0xff] %vm251, 0.0
  %262 = vst.msk [vmem:[#allocation2 + $0x48] sm:$0x3] %vm253, 0.0
  %263 = vst.msk [vmem:[#allocation2 + $0x50] sm:$0xff] %vm251, 0.0
  %264 = vst.msk [vmem:[#allocation2 + $0x58] sm:$0x3] %vm253, 0.0
  %265 = vst.msk [vmem:[#allocation2 + $0x60] sm:$0xff] %vm251, 0.0
  %266 = vst.msk [vmem:[#allocation2 + $0x68] sm:$0x3] %vm253, 0.0
  %267 = vst.msk [vmem:[#allocation2 + $0x70] sm:$0xff] %vm251, 0.0
  %268 = vst.msk [vmem:[#allocation2 + $0x78] sm:$0x3] %vm253, 0.0
  %269 = vst.msk [vmem:[#allocation2 + $0x80] sm:$0xff] %vm251, 0.0
  %270 = vst.msk [vmem:[#allocation2 + $0x88] sm:$0x3] %vm253, 0.0
  %271 = vst.msk [vmem:[#allocation2 + $0x90] sm:$0xff] %vm251, 0.0
  %272 = vst.msk [vmem:[#allocation2 + $0x98] sm:$0x3] %vm253, 0.0
  %273 = vst.msk [vmem:[#allocation2 + $0xa0] sm:$0xff] %vm251, 0.0
  %274 = vst.msk [vmem:[#allocation2 + $0xa8] sm:$0x3] %vm253, 0.0
  %275 = vst.msk [vmem:[#allocation2 + $0xb0] sm:$0xff] %vm251, 0.0
  %276 = vst.msk [vmem:[#allocation2 + $0xb8] sm:$0x3] %vm253, 0.0
  %277 = vst.msk [vmem:[#allocation2 + $0xc0] sm:$0xff] %vm251, 0.0
  %278 = vst.msk [vmem:[#allocation2 + $0xc8] sm:$0x3] %vm253, 0.0
  %279 = vst.msk [vmem:[#allocation2 + $0xd0] sm:$0xff] %vm251, 0.0
  %280 = vst.msk [vmem:[#allocation2 + $0xd8] sm:$0x3] %vm253, 0.0
  %281 = vst.msk [vmem:[#allocation2 + $0xe0] sm:$0xff] %vm251, 0.0
  %282 = vst.msk [vmem:[#allocation2 + $0xe8] sm:$0x3] %vm253, 0.0
  %283 = vst.msk [vmem:[#allocation2 + $0xf0] sm:$0xff] %vm251, 0.0
  %284 = vst.msk [vmem:[#allocation2 + $0xf8] sm:$0x3] %vm253, 0.0
  %285 = vst.msk [vmem:[#allocation2 + $0x100] sm:$0xff] %vm251, 0.0
  %286 = vst.msk [vmem:[#allocation2 + $0x108] sm:$0x3] %vm253, 0.0
  %287 = vst.msk [vmem:[#allocation2 + $0x110] sm:$0xff] %vm251, 0.0
  %288 = vst.msk [vmem:[#allocation2 + $0x118] sm:$0x3] %vm253, 0.0
  %289 = vst.msk [vmem:[#allocation2 + $0x120] sm:$0xff] %vm251, 0.0
  %290 = vst.msk [vmem:[#allocation2 + $0x128] sm:$0x3] %vm253, 0.0
  %291 = vst.msk [vmem:[#allocation2 + $0x130] sm:$0xff] %vm251, 0.0
  %292 = vst.msk [vmem:[#allocation2 + $0x138] sm:$0x3] %vm253, 0.0
  %s293 = scalar_lea.vmem [#allocation2], 16
  %294 = vst.msk [vmem:[%s293 + $0x1] sm:$0xff] %vm251, %v235
  %295 = vst.msk [vmem:[%s293 + $0x11] sm:$0xff] %vm251, %v236
  %296 = vst.msk [vmem:[%s293 + $0x21] sm:$0xff] %vm251, %v237
  %297 = vst.msk [vmem:[%s293 + $0x31] sm:$0xff] %vm251, %v238
  %298 = vst.msk [vmem:[%s293 + $0x41] sm:$0xff] %vm251, %v239
  %299 = vst.msk [vmem:[%s293 + $0x51] sm:$0xff] %vm251, %v240
  %300 = vst.msk [vmem:[%s293 + $0x61] sm:$0xff] %vm251, %v241
  %301 = vst.msk [vmem:[%s293 + $0x71] sm:$0xff] %vm251, %v242
  %302 = vst.msk [vmem:[%s293 + $0xa1] sm:$0xff] %vm251, %v243
  %303 = vst.msk [vmem:[%s293 + $0xb1] sm:$0xff] %vm251, %v244
  %304 = vst.msk [vmem:[%s293 + $0xc1] sm:$0xff] %vm251, %v245
  %305 = vst.msk [vmem:[%s293 + $0xd1] sm:$0xff] %vm251, %v246
  %306 = vst.msk [vmem:[%s293 + $0xe1] sm:$0xff] %vm251, %v247
  %307 = vst.msk [vmem:[%s293 + $0xf1] sm:$0xff] %vm251, %v248
  %308 = vst.msk [vmem:[%s293 + $0x101] sm:$0xff] %vm251, %v249
  %309 = vst.msk [vmem:[%s293 + $0x111] sm:$0xff] %vm251, %v250
  %v310 = vld [vmem:[#allocation2] sm:$0x7f]
  %v311 = vld [vmem:[#allocation2 + $0x10] sm:$0x7f]
  %v312 = vld [vmem:[#allocation2 + $0x20] sm:$0x7f]
  %v313 = vld [vmem:[#allocation2 + $0x30] sm:$0x7f]
  %v314 = vld [vmem:[#allocation2 + $0x40] sm:$0x7f]
  %v315 = vld [vmem:[#allocation2 + $0x50] sm:$0x7f]
  %v316 = vld [vmem:[#allocation2 + $0x60] sm:$0x7f]
  %v317 = vld [vmem:[#allocation2 + $0xa0] sm:$0x7f]
  %v318 = vld [vmem:[#allocation2 + $0xb0] sm:$0x7f]
  %v319 = vld [vmem:[#allocation2 + $0xc0] sm:$0x7f]
  %v320 = vld [vmem:[#allocation2 + $0xd0] sm:$0x7f]
  %v321 = vld [vmem:[#allocation2 + $0xe0] sm:$0x7f]
  %v322 = vld [vmem:[#allocation2 + $0xf0] sm:$0x7f]
  %v323 = vld [vmem:[#allocation2 + $0x100] sm:$0x7f]
  %v324 = vld [vmem:[%s3] sm:$0x1]
  %v325 = vperm.slane %v324, 0
  %v326 = vmul.f32 %v310, %v325
  %v327 = vmul.f32 %v311, %v325
  %v328 = vmul.f32 %v312, %v325
  %v329 = vmul.f32 %v313, %v325
  %v330 = vmul.f32 %v314, %v325
  %v331 = vmul.f32 %v315, %v325
  %v332 = vmul.f32 %v316, %v325
  %v333 = vmul.f32 %v317, %v325
  %v334 = vmul.f32 %v318, %v325
  %v335 = vmul.f32 %v319, %v325
  %v336 = vmul.f32 %v320, %v325
  %v337 = vmul.f32 %v321, %v325
  %v338 = vmul.f32 %v322, %v325
  %v339 = vmul.f32 %v323, %v325
  %v340 = vadd.f32 %v326, 0.0
  %v341 = vadd.f32 %v327, 0.0
  %v342 = vadd.f32 %v328, 0.0
  %v343 = vadd.f32 %v329, 0.0
  %v344 = vadd.f32 %v330, 0.0
  %v345 = vadd.f32 %v331, 0.0
  %v346 = vadd.f32 %v332, 0.0
  %v347 = vadd.f32 %v333, 0.0
  %v348 = vadd.f32 %v334, 0.0
  %v349 = vadd.f32 %v335, 0.0
  %v350 = vadd.f32 %v336, 0.0
  %v351 = vadd.f32 %v337, 0.0
  %v352 = vadd.f32 %v338, 0.0
  %v353 = vadd.f32 %v339, 0.0
  %v354 = vld [vmem:[#allocation2 + $0x1] sm:$0x7f]
  %v355 = vld [vmem:[#allocation2 + $0x11] sm:$0x7f]
  %v356 = vld [vmem:[#allocation2 + $0x21] sm:$0x7f]
  %v357 = vld [vmem:[#allocation2 + $0x31] sm:$0x7f]
  %v358 = vld [vmem:[#allocation2 + $0x41] sm:$0x7f]
  %v359 = vld [vmem:[#allocation2 + $0x51] sm:$0x7f]
  %v360 = vld [vmem:[#allocation2 + $0x61] sm:$0x7f]
  %v361 = vld [vmem:[#allocation2 + $0xa1] sm:$0x7f]
  %v362 = vld [vmem:[#allocation2 + $0xb1] sm:$0x7f]
  %v363 = vld [vmem:[#allocation2 + $0xc1] sm:$0x7f]
  %v364 = vld [vmem:[#allocation2 + $0xd1] sm:$0x7f]
  %v365 = vld [vmem:[#allocation2 + $0xe1] sm:$0x7f]
  %v366 = vld [vmem:[#allocation2 + $0xf1] sm:$0x7f]
  %v367 = vld [vmem:[#allocation2 + $0x101] sm:$0x7f]
  %v368 = vld [vmem:[%s3 + $0x1] sm:$0x1]
  %v369 = vperm.slane %v368, 0
  %v370 = vmul.f32 %v354, %v369
  %v371 = vmul.f32 %v355, %v369
  %v372 = vmul.f32 %v356, %v369
  %v373 = vmul.f32 %v357, %v369
  %v374 = vmul.f32 %v358, %v369
  %v375 = vmul.f32 %v359, %v369
  %v376 = vmul.f32 %v360, %v369
  %v377 = vmul.f32 %v361, %v369
  %v378 = vmul.f32 %v362, %v369
  %v379 = vmul.f32 %v363, %v369
  %v380 = vmul.f32 %v364, %v369
  %v381 = vmul.f32 %v365, %v369
  %v382 = vmul.f32 %v366, %v369
  %v383 = vmul.f32 %v367, %v369
  %v384 = vadd.f32 %v340, %v370
  %v385 = vadd.f32 %v341, %v371
  %v386 = vadd.f32 %v342, %v372
  %v387 = vadd.f32 %v343, %v373
  %v388 = vadd.f32 %v344, %v374
  %v389 = vadd.f32 %v345, %v375
  %v390 = vadd.f32 %v346, %v376
  %v391 = vadd.f32 %v347, %v377
  %v392 = vadd.f32 %v348, %v378
  %v393 = vadd.f32 %v349, %v379
  %v394 = vadd.f32 %v350, %v380
  %v395 = vadd.f32 %v351, %v381
  %v396 = vadd.f32 %v352, %v382
  %v397 = vadd.f32 %v353, %v383
  %v398 = vld [vmem:[#allocation2 + $0x2] sm:$0x7f]
  %v399 = vld [vmem:[#allocation2 + $0x12] sm:$0x7f]
  %v400 = vld [vmem:[#allocation2 + $0x22] sm:$0x7f]
  %v401 = vld [vmem:[#allocation2 + $0x32] sm:$0x7f]
  %v402 = vld [vmem:[#allocation2 + $0x42] sm:$0x7f]
  %v403 = vld [vmem:[#allocation2 + $0x52] sm:$0x7f]
  %v404 = vld [vmem:[#allocation2 + $0x62] sm:$0x7f]
  %v405 = vld [vmem:[#allocation2 + $0xa2] sm:$0x7f]
  %v406 = vld [vmem:[#allocation2 + $0xb2] sm:$0x7f]
  %v407 = vld [vmem:[#allocation2 + $0xc2] sm:$0x7f]
  %v408 = vld [vmem:[#allocation2 + $0xd2] sm:$0x7f]
  %v409 = vld [vmem:[#allocation2 + $0xe2] sm:$0x7f]
  %v410 = vld [vmem:[#allocation2 + $0xf2] sm:$0x7f]
  %v411 = vld [vmem:[#allocation2 + $0x102] sm:$0x7f]
  %v412 = vld [vmem:[%s3 + $0x2] sm:$0x1]
  %v413 = vperm.slane %v412, 0
  %v414 = vmul.f32 %v398, %v413
  %v415 = vmul.f32 %v399, %v413
  %v416 = vmul.f32 %v400, %v413
  %v417 = vmul.f32 %v401, %v413
  %v418 = vmul.f32 %v402, %v413
  %v419 = vmul.f32 %v403, %v413
  %v420 = vmul.f32 %v404, %v413
  %v421 = vmul.f32 %v405, %v413
  %v422 = vmul.f32 %v406, %v413
  %v423 = vmul.f32 %v407, %v413
  %v424 = vmul.f32 %v408, %v413
  %v425 = vmul.f32 %v409, %v413
  %v426 = vmul.f32 %v410, %v413
  %v427 = vmul.f32 %v411, %v413
  %v428 = vadd.f32 %v384, %v414
  %v429 = vadd.f32 %v385, %v415
  %v430 = vadd.f32 %v386, %v416
  %v431 = vadd.f32 %v387, %v417
  %v432 = vadd.f32 %v388, %v418
  %v433 = vadd.f32 %v389, %v419
  %v434 = vadd.f32 %v390, %v420
  %v435 = vadd.f32 %v391, %v421
  %v436 = vadd.f32 %v392, %v422
  %v437 = vadd.f32 %v393, %v423
  %v438 = vadd.f32 %v394, %v424
  %v439 = vadd.f32 %v395, %v425
  %v440 = vadd.f32 %v396, %v426
  %v441 = vadd.f32 %v397, %v427
  %v442 = vld [vmem:[#allocation2 + $0x3] sm:$0x7f]
  %v443 = vld [vmem:[#allocation2 + $0x13] sm:$0x7f]
  %v444 = vld [vmem:[#allocation2 + $0x23] sm:$0x7f]
  %v445 = vld [vmem:[#allocation2 + $0x33] sm:$0x7f]
  %v446 = vld [vmem:[#allocation2 + $0x43] sm:$0x7f]
  %v447 = vld [vmem:[#allocation2 + $0x53] sm:$0x7f]
  %v448 = vld [vmem:[#allocation2 + $0x63] sm:$0x7f]
  %v449 = vld [vmem:[#allocation2 + $0xa3] sm:$0x7f]
  %v450 = vld [vmem:[#allocation2 + $0xb3] sm:$0x7f]
  %v451 = vld [vmem:[#allocation2 + $0xc3] sm:$0x7f]
  %v452 = vld [vmem:[#allocation2 + $0xd3] sm:$0x7f]
  %v453 = vld [vmem:[#allocation2 + $0xe3] sm:$0x7f]
  %v454 = vld [vmem:[#allocation2 + $0xf3] sm:$0x7f]
  %v455 = vld [vmem:[#allocation2 + $0x103] sm:$0x7f]
  %v456 = vld [vmem:[%s3 + $0x3] sm:$0x1]
  %v457 = vperm.slane %v456, 0
  %v458 = vmul.f32 %v442, %v457
  %v459 = vmul.f32 %v443, %v457
  %v460 = vmul.f32 %v444, %v457
  %v461 = vmul.f32 %v445, %v457
  %v462 = vmul.f32 %v446, %v457
  %v463 = vmul.f32 %v447, %v457
  %v464 = vmul.f32 %v448, %v457
  %v465 = vmul.f32 %v449, %v457
  %v466 = vmul.f32 %v450, %v457
  %v467 = vmul.f32 %v451, %v457
  %v468 = vmul.f32 %v452, %v457
  %v469 = vmul.f32 %v453, %v457
  %v470 = vmul.f32 %v454, %v457
  %v471 = vmul.f32 %v455, %v457
  %v472 = vadd.f32 %v428, %v458
  %v473 = vadd.f32 %v429, %v459
  %v474 = vadd.f32 %v430, %v460
  %v475 = vadd.f32 %v431, %v461
  %v476 = vadd.f32 %v432, %v462
  %v477 = vadd.f32 %v433, %v463
  %v478 = vadd.f32 %v434, %v464
  %v479 = vadd.f32 %v435, %v465
  %v480 = vadd.f32 %v436, %v466
  %v481 = vadd.f32 %v437, %v467
  %v482 = vadd.f32 %v438, %v468
  %v483 = vadd.f32 %v439, %v469
  %v484 = vadd.f32 %v440, %v470
  %v485 = vadd.f32 %v441, %v471
  %v486 = vld [vmem:[%s293] sm:$0x7f]
  %v487 = vld [vmem:[%s293 + $0x10] sm:$0x7f]
  %v488 = vld [vmem:[%s293 + $0x20] sm:$0x7f]
  %v489 = vld [vmem:[%s293 + $0x30] sm:$0x7f]
  %v490 = vld [vmem:[%s293 + $0x40] sm:$0x7f]
  %v491 = vld [vmem:[%s293 + $0x50] sm:$0x7f]
  %v492 = vld [vmem:[%s293 + $0x60] sm:$0x7f]
  %v493 = vld [vmem:[%s293 + $0xa0] sm:$0x7f]
  %v494 = vld [vmem:[%s293 + $0xb0] sm:$0x7f]
  %v495 = vld [vmem:[%s293 + $0xc0] sm:$0x7f]
  %v496 = vld [vmem:[%s293 + $0xd0] sm:$0x7f]
  %v497 = vld [vmem:[%s293 + $0xe0] sm:$0x7f]
  %v498 = vld [vmem:[%s293 + $0xf0] sm:$0x7f]
  %v499 = vld [vmem:[%s293 + $0x100] sm:$0x7f]
  %v500 = vld [vmem:[%s3 + $0x4] sm:$0x1]
  %v501 = vperm.slane %v500, 0
  %v502 = vmul.f32 %v486, %v501
  %v503 = vmul.f32 %v487, %v501
  %v504 = vmul.f32 %v488, %v501
  %v505 = vmul.f32 %v489, %v501
  %v506 = vmul.f32 %v490, %v501
  %v507 = vmul.f32 %v491, %v501
  %v508 = vmul.f32 %v492, %v501
  %v509 = vmul.f32 %v493, %v501
  %v510 = vmul.f32 %v494, %v501
  %v511 = vmul.f32 %v495, %v501
  %v512 = vmul.f32 %v496, %v501
  %v513 = vmul.f32 %v497, %v501
  %v514 = vmul.f32 %v498, %v501
  %v515 = vmul.f32 %v499, %v501
  %v516 = vadd.f32 %v472, %v502
  %v517 = vadd.f32 %v473, %v503
  %v518 = vadd.f32 %v474, %v504
  %v519 = vadd.f32 %v475, %v505
  %v520 = vadd.f32 %v476, %v506
  %v521 = vadd.f32 %v477, %v507
  %v522 = vadd.f32 %v478, %v508
  %v523 = vadd.f32 %v479, %v509
  %v524 = vadd.f32 %v480, %v510
  %v525 = vadd.f32 %v481, %v511
  %v526 = vadd.f32 %v482, %v512
  %v527 = vadd.f32 %v483, %v513
  %v528 = vadd.f32 %v484, %v514
  %v529 = vadd.f32 %v485, %v515
  %v530 = vld [vmem:[%s293 + $0x1] sm:$0x7f]
  %v531 = vld [vmem:[%s293 + $0x11] sm:$0x7f]
  %v532 = vld [vmem:[%s293 + $0x21] sm:$0x7f]
  %v533 = vld [vmem:[%s293 + $0x31] sm:$0x7f]
  %v534 = vld [vmem:[%s293 + $0x41] sm:$0x7f]
  %v535 = vld [vmem:[%s293 + $0x51] sm:$0x7f]
  %v536 = vld [vmem:[%s293 + $0x61] sm:$0x7f]
  %v537 = vld [vmem:[%s293 + $0xa1] sm:$0x7f]
  %v538 = vld [vmem:[%s293 + $0xb1] sm:$0x7f]
  %v539 = vld [vmem:[%s293 + $0xc1] sm:$0x7f]
  %v540 = vld [vmem:[%s293 + $0xd1] sm:$0x7f]
  %v541 = vld [vmem:[%s293 + $0xe1] sm:$0x7f]
  %v542 = vld [vmem:[%s293 + $0xf1] sm:$0x7f]
  %v543 = vld [vmem:[%s293 + $0x101] sm:$0x7f]
  %v544 = vld [vmem:[%s3 + $0x5] sm:$0x1]
  %v545 = vperm.slane %v544, 0
  %v546 = vmul.f32 %v530, %v545
  %v547 = vmul.f32 %v531, %v545
  %v548 = vmul.f32 %v532, %v545
  %v549 = vmul.f32 %v533, %v545
  %v550 = vmul.f32 %v534, %v545
  %v551 = vmul.f32 %v535, %v545
  %v552 = vmul.f32 %v536, %v545
  %v553 = vmul.f32 %v537, %v545
  %v554 = vmul.f32 %v538, %v545
  %v555 = vmul.f32 %v539, %v545
  %v556 = vmul.f32 %v540, %v545
  %v557 = vmul.f32 %v541, %v545
  %v558 = vmul.f32 %v542, %v545
  %v559 = vmul.f32 %v543, %v545
  %v560 = vadd.f32 %v516, %v546
  %v561 = vadd.f32 %v517, %v547
  %v562 = vadd.f32 %v518, %v548
  %v563 = vadd.f32 %v519, %v549
  %v564 = vadd.f32 %v520, %v550
  %v565 = vadd.f32 %v521, %v551
  %v566 = vadd.f32 %v522, %v552
  %v567 = vadd.f32 %v523, %v553
  %v568 = vadd.f32 %v524, %v554
  %v569 = vadd.f32 %v525, %v555
  %v570 = vadd.f32 %v526, %v556
  %v571 = vadd.f32 %v527, %v557
  %v572 = vadd.f32 %v528, %v558
  %v573 = vadd.f32 %v529, %v559
  %v574 = vld [vmem:[%s293 + $0x2] sm:$0x7f]
  %v575 = vld [vmem:[%s293 + $0x12] sm:$0x7f]
  %v576 = vld [vmem:[%s293 + $0x22] sm:$0x7f]
  %v577 = vld [vmem:[%s293 + $0x32] sm:$0x7f]
  %v578 = vld [vmem:[%s293 + $0x42] sm:$0x7f]
  %v579 = vld [vmem:[%s293 + $0x52] sm:$0x7f]
  %v580 = vld [vmem:[%s293 + $0x62] sm:$0x7f]
  %v581 = vld [vmem:[%s293 + $0xa2] sm:$0x7f]
  %v582 = vld [vmem:[%s293 + $0xb2] sm:$0x7f]
  %v583 = vld [vmem:[%s293 + $0xc2] sm:$0x7f]
  %v584 = vld [vmem:[%s293 + $0xd2] sm:$0x7f]
  %v585 = vld [vmem:[%s293 + $0xe2] sm:$0x7f]
  %v586 = vld [vmem:[%s293 + $0xf2] sm:$0x7f]
  %v587 = vld [vmem:[%s293 + $0x102] sm:$0x7f]
  %v588 = vld [vmem:[%s3 + $0x6] sm:$0x1]
  %v589 = vperm.slane %v588, 0
  %v590 = vmul.f32 %v574, %v589
  %v591 = vmul.f32 %v575, %v589
  %v592 = vmul.f32 %v576, %v589
  %v593 = vmul.f32 %v577, %v589
  %v594 = vmul.f32 %v578, %v589
  %v595 = vmul.f32 %v579, %v589
  %v596 = vmul.f32 %v580, %v589
  %v597 = vmul.f32 %v581, %v589
  %v598 = vmul.f32 %v582, %v589
  %v599 = vmul.f32 %v583, %v589
  %v600 = vmul.f32 %v584, %v589
  %v601 = vmul.f32 %v585, %v589
  %v602 = vmul.f32 %v586, %v589
  %v603 = vmul.f32 %v587, %v589
  %v604 = vadd.f32 %v560, %v590
  %v605 = vadd.f32 %v561, %v591
  %v606 = vadd.f32 %v562, %v592
  %v607 = vadd.f32 %v563, %v593
  %v608 = vadd.f32 %v564, %v594
  %v609 = vadd.f32 %v565, %v595
  %v610 = vadd.f32 %v566, %v596
  %v611 = vadd.f32 %v567, %v597
  %v612 = vadd.f32 %v568, %v598
  %v613 = vadd.f32 %v569, %v599
  %v614 = vadd.f32 %v570, %v600
  %v615 = vadd.f32 %v571, %v601
  %v616 = vadd.f32 %v572, %v602
  %v617 = vadd.f32 %v573, %v603
  %v618 = vld [vmem:[%s293 + $0x3] sm:$0x7f]
  %v619 = vld [vmem:[%s293 + $0x13] sm:$0x7f]
  %v620 = vld [vmem:[%s293 + $0x23] sm:$0x7f]
  %v621 = vld [vmem:[%s293 + $0x33] sm:$0x7f]
  %v622 = vld [vmem:[%s293 + $0x43] sm:$0x7f]
  %v623 = vld [vmem:[%s293 + $0x53] sm:$0x7f]
  %v624 = vld [vmem:[%s293 + $0x63] sm:$0x7f]
  %v625 = vld [vmem:[%s293 + $0xa3] sm:$0x7f]
  %v626 = vld [vmem:[%s293 + $0xb3] sm:$0x7f]
  %v627 = vld [vmem:[%s293 + $0xc3] sm:$0x7f]
  %v628 = vld [vmem:[%s293 + $0xd3] sm:$0x7f]
  %v629 = vld [vmem:[%s293 + $0xe3] sm:$0x7f]
  %v630 = vld [vmem:[%s293 + $0xf3] sm:$0x7f]
  %v631 = vld [vmem:[%s293 + $0x103] sm:$0x7f]
  %v632 = vld [vmem:[%s3 + $0x7] sm:$0x1]
  %v633 = vperm.slane %v632, 0
  %v634 = vmul.f32 %v618, %v633
  %v635 = vmul.f32 %v619, %v633
  %v636 = vmul.f32 %v620, %v633
  %v637 = vmul.f32 %v621, %v633
  %v638 = vmul.f32 %v622, %v633
  %v639 = vmul.f32 %v623, %v633
  %v640 = vmul.f32 %v624, %v633
  %v641 = vmul.f32 %v625, %v633
  %v642 = vmul.f32 %v626, %v633
  %v643 = vmul.f32 %v627, %v633
  %v644 = vmul.f32 %v628, %v633
  %v645 = vmul.f32 %v629, %v633
  %v646 = vmul.f32 %v630, %v633
  %v647 = vmul.f32 %v631, %v633
  %v648 = vadd.f32 %v604, %v634
  %v649 = vadd.f32 %v605, %v635
  %v650 = vadd.f32 %v606, %v636
  %v651 = vadd.f32 %v607, %v637
  %v652 = vadd.f32 %v608, %v638
  %v653 = vadd.f32 %v609, %v639
  %v654 = vadd.f32 %v610, %v640
  %v655 = vadd.f32 %v611, %v641
  %v656 = vadd.f32 %v612, %v642
  %v657 = vadd.f32 %v613, %v643
  %v658 = vadd.f32 %v614, %v644
  %v659 = vadd.f32 %v615, %v645
  %v660 = vadd.f32 %v616, %v646
  %v661 = vadd.f32 %v617, %v647
  %s662 = scalar_lea.vmem [#allocation2], 32
  %v663 = vld [vmem:[%s662] sm:$0x7f]
  %v664 = vld [vmem:[%s662 + $0x10] sm:$0x7f]
  %v665 = vld [vmem:[%s662 + $0x20] sm:$0x7f]
  %v666 = vld [vmem:[%s662 + $0x30] sm:$0x7f]
  %v667 = vld [vmem:[%s662 + $0x40] sm:$0x7f]
  %v668 = vld [vmem:[%s662 + $0x50] sm:$0x7f]
  %v669 = vld [vmem:[%s662 + $0x60] sm:$0x7f]
  %v670 = vld [vmem:[%s662 + $0xa0] sm:$0x7f]
  %v671 = vld [vmem:[%s662 + $0xb0] sm:$0x7f]
  %v672 = vld [vmem:[%s662 + $0xc0] sm:$0x7f]
  %v673 = vld [vmem:[%s662 + $0xd0] sm:$0x7f]
  %v674 = vld [vmem:[%s662 + $0xe0] sm:$0x7f]
  %v675 = vld [vmem:[%s662 + $0xf0] sm:$0x7f]
  %v676 = vld [vmem:[%s662 + $0x100] sm:$0x7f]
  %v677 = vld [vmem:[%s3 + $0x8] sm:$0x1]
  %v678 = vperm.slane %v677, 0
  %v679 = vmul.f32 %v663, %v678
  %v680 = vmul.f32 %v664, %v678
  %v681 = vmul.f32 %v665, %v678
  %v682 = vmul.f32 %v666, %v678
  %v683 = vmul.f32 %v667, %v678
  %v684 = vmul.f32 %v668, %v678
  %v685 = vmul.f32 %v669, %v678
  %v686 = vmul.f32 %v670, %v678
  %v687 = vmul.f32 %v671, %v678
  %v688 = vmul.f32 %v672, %v678
  %v689 = vmul.f32 %v673, %v678
  %v690 = vmul.f32 %v674, %v678
  %v691 = vmul.f32 %v675, %v678
  %v692 = vmul.f32 %v676, %v678
  %v693 = vadd.f32 %v648, %v679
  %v694 = vadd.f32 %v649, %v680
  %v695 = vadd.f32 %v650, %v681
  %v696 = vadd.f32 %v651, %v682
  %v697 = vadd.f32 %v652, %v683
  %v698 = vadd.f32 %v653, %v684
  %v699 = vadd.f32 %v654, %v685
  %v700 = vadd.f32 %v655, %v686
  %v701 = vadd.f32 %v656, %v687
  %v702 = vadd.f32 %v657, %v688
  %v703 = vadd.f32 %v658, %v689
  %v704 = vadd.f32 %v659, %v690
  %v705 = vadd.f32 %v660, %v691
  %v706 = vadd.f32 %v661, %v692
  %v707 = vld [vmem:[%s662 + $0x1] sm:$0x7f]
  %v708 = vld [vmem:[%s662 + $0x11] sm:$0x7f]
  %v709 = vld [vmem:[%s662 + $0x21] sm:$0x7f]
  %v710 = vld [vmem:[%s662 + $0x31] sm:$0x7f]
  %v711 = vld [vmem:[%s662 + $0x41] sm:$0x7f]
  %v712 = vld [vmem:[%s662 + $0x51] sm:$0x7f]
  %v713 = vld [vmem:[%s662 + $0x61] sm:$0x7f]
  %v714 = vld [vmem:[%s662 + $0xa1] sm:$0x7f]
  %v715 = vld [vmem:[%s662 + $0xb1] sm:$0x7f]
  %v716 = vld [vmem:[%s662 + $0xc1] sm:$0x7f]
  %v717 = vld [vmem:[%s662 + $0xd1] sm:$0x7f]
  %v718 = vld [vmem:[%s662 + $0xe1] sm:$0x7f]
  %v719 = vld [vmem:[%s662 + $0xf1] sm:$0x7f]
  %v720 = vld [vmem:[%s662 + $0x101] sm:$0x7f]
  %v721 = vld [vmem:[%s3 + $0x9] sm:$0x1]
  %v722 = vperm.slane %v721, 0
  %v723 = vmul.f32 %v707, %v722
  %v724 = vmul.f32 %v708, %v722
  %v725 = vmul.f32 %v709, %v722
  %v726 = vmul.f32 %v710, %v722
  %v727 = vmul.f32 %v711, %v722
  %v728 = vmul.f32 %v712, %v722
  %v729 = vmul.f32 %v713, %v722
  %v730 = vmul.f32 %v714, %v722
  %v731 = vmul.f32 %v715, %v722
  %v732 = vmul.f32 %v716, %v722
  %v733 = vmul.f32 %v717, %v722
  %v734 = vmul.f32 %v718, %v722
  %v735 = vmul.f32 %v719, %v722
  %v736 = vmul.f32 %v720, %v722
  %v737 = vadd.f32 %v693, %v723
  %v738 = vadd.f32 %v694, %v724
  %v739 = vadd.f32 %v695, %v725
  %v740 = vadd.f32 %v696, %v726
  %v741 = vadd.f32 %v697, %v727
  %v742 = vadd.f32 %v698, %v728
  %v743 = vadd.f32 %v699, %v729
  %v744 = vadd.f32 %v700, %v730
  %v745 = vadd.f32 %v701, %v731
  %v746 = vadd.f32 %v702, %v732
  %v747 = vadd.f32 %v703, %v733
  %v748 = vadd.f32 %v704, %v734
  %v749 = vadd.f32 %v705, %v735
  %v750 = vadd.f32 %v706, %v736
  %v751 = vld [vmem:[%s662 + $0x2] sm:$0x7f]
  %v752 = vld [vmem:[%s662 + $0x12] sm:$0x7f]
  %v753 = vld [vmem:[%s662 + $0x22] sm:$0x7f]
  %v754 = vld [vmem:[%s662 + $0x32] sm:$0x7f]
  %v755 = vld [vmem:[%s662 + $0x42] sm:$0x7f]
  %v756 = vld [vmem:[%s662 + $0x52] sm:$0x7f]
  %v757 = vld [vmem:[%s662 + $0x62] sm:$0x7f]
  %v758 = vld [vmem:[%s662 + $0xa2] sm:$0x7f]
  %v759 = vld [vmem:[%s662 + $0xb2] sm:$0x7f]
  %v760 = vld [vmem:[%s662 + $0xc2] sm:$0x7f]
  %v761 = vld [vmem:[%s662 + $0xd2] sm:$0x7f]
  %v762 = vld [vmem:[%s662 + $0xe2] sm:$0x7f]
  %v763 = vld [vmem:[%s662 + $0xf2] sm:$0x7f]
  %v764 = vld [vmem:[%s662 + $0x102] sm:$0x7f]
  %v765 = vld [vmem:[%s3 + $0xa] sm:$0x1]
  %v766 = vperm.slane %v765, 0
  %v767 = vmul.f32 %v751, %v766
  %v768 = vmul.f32 %v752, %v766
  %v769 = vmul.f32 %v753, %v766
  %v770 = vmul.f32 %v754, %v766
  %v771 = vmul.f32 %v755, %v766
  %v772 = vmul.f32 %v756, %v766
  %v773 = vmul.f32 %v757, %v766
  %v774 = vmul.f32 %v758, %v766
  %v775 = vmul.f32 %v759, %v766
  %v776 = vmul.f32 %v760, %v766
  %v777 = vmul.f32 %v761, %v766
  %v778 = vmul.f32 %v762, %v766
  %v779 = vmul.f32 %v763, %v766
  %v780 = vmul.f32 %v764, %v766
  %v781 = vadd.f32 %v737, %v767
  %v782 = vadd.f32 %v738, %v768
  %v783 = vadd.f32 %v739, %v769
  %v784 = vadd.f32 %v740, %v770
  %v785 = vadd.f32 %v741, %v771
  %v786 = vadd.f32 %v742, %v772
  %v787 = vadd.f32 %v743, %v773
  %v788 = vadd.f32 %v744, %v774
  %v789 = vadd.f32 %v745, %v775
  %v790 = vadd.f32 %v746, %v776
  %v791 = vadd.f32 %v747, %v777
  %v792 = vadd.f32 %v748, %v778
  %v793 = vadd.f32 %v749, %v779
  %v794 = vadd.f32 %v750, %v780
  %v795 = vld [vmem:[%s662 + $0x3] sm:$0x7f]
  %v796 = vld [vmem:[%s662 + $0x13] sm:$0x7f]
  %v797 = vld [vmem:[%s662 + $0x23] sm:$0x7f]
  %v798 = vld [vmem:[%s662 + $0x33] sm:$0x7f]
  %v799 = vld [vmem:[%s662 + $0x43] sm:$0x7f]
  %v800 = vld [vmem:[%s662 + $0x53] sm:$0x7f]
  %v801 = vld [vmem:[%s662 + $0x63] sm:$0x7f]
  %v802 = vld [vmem:[%s662 + $0xa3] sm:$0x7f]
  %v803 = vld [vmem:[%s662 + $0xb3] sm:$0x7f]
  %v804 = vld [vmem:[%s662 + $0xc3] sm:$0x7f]
  %v805 = vld [vmem:[%s662 + $0xd3] sm:$0x7f]
  %v806 = vld [vmem:[%s662 + $0xe3] sm:$0x7f]
  %v807 = vld [vmem:[%s662 + $0xf3] sm:$0x7f]
  %v808 = vld [vmem:[%s662 + $0x103] sm:$0x7f]
  %v809 = vld [vmem:[%s3 + $0xb] sm:$0x1]
  %v810 = vperm.slane %v809, 0
  %v811 = vmul.f32 %v795, %v810
  %v812 = vmul.f32 %v796, %v810
  %v813 = vmul.f32 %v797, %v810
  %v814 = vmul.f32 %v798, %v810
  %v815 = vmul.f32 %v799, %v810
  %v816 = vmul.f32 %v800, %v810
  %v817 = vmul.f32 %v801, %v810
  %v818 = vmul.f32 %v802, %v810
  %v819 = vmul.f32 %v803, %v810
  %v820 = vmul.f32 %v804, %v810
  %v821 = vmul.f32 %v805, %v810
  %v822 = vmul.f32 %v806, %v810
  %v823 = vmul.f32 %v807, %v810
  %v824 = vmul.f32 %v808, %v810
  %v825 = vadd.f32 %v781, %v811
  %v826 = vadd.f32 %v782, %v812
  %v827 = vadd.f32 %v783, %v813
  %v828 = vadd.f32 %v784, %v814
  %v829 = vadd.f32 %v785, %v815
  %v830 = vadd.f32 %v786, %v816
  %v831 = vadd.f32 %v787, %v817
  %v832 = vadd.f32 %v788, %v818
  %v833 = vadd.f32 %v789, %v819
  %v834 = vadd.f32 %v790, %v820
  %v835 = vadd.f32 %v791, %v821
  %v836 = vadd.f32 %v792, %v822
  %v837 = vadd.f32 %v793, %v823
  %v838 = vadd.f32 %v794, %v824
  %s839 = scalar_lea.vmem [#allocation2], 48
  %v840 = vld [vmem:[%s839] sm:$0x7f]
  %v841 = vld [vmem:[%s839 + $0x10] sm:$0x7f]
  %v842 = vld [vmem:[%s839 + $0x20] sm:$0x7f]
  %v843 = vld [vmem:[%s839 + $0x30] sm:$0x7f]
  %v844 = vld [vmem:[%s839 + $0x40] sm:$0x7f]
  %v845 = vld [vmem:[%s839 + $0x50] sm:$0x7f]
  %v846 = vld [vmem:[%s839 + $0x60] sm:$0x7f]
  %v847 = vld [vmem:[%s839 + $0xa0] sm:$0x7f]
  %v848 = vld [vmem:[%s839 + $0xb0] sm:$0x7f]
  %v849 = vld [vmem:[%s839 + $0xc0] sm:$0x7f]
  %v850 = vld [vmem:[%s839 + $0xd0] sm:$0x7f]
  %v851 = vld [vmem:[%s839 + $0xe0] sm:$0x7f]
  %v852 = vld [vmem:[%s839 + $0xf0] sm:$0x7f]
  %v853 = vld [vmem:[%s839 + $0x100] sm:$0x7f]
  %v854 = vld [vmem:[%s3 + $0xc] sm:$0x1]
  %v855 = vperm.slane %v854, 0
  %v856 = vmul.f32 %v840, %v855
  %v857 = vmul.f32 %v841, %v855
  %v858 = vmul.f32 %v842, %v855
  %v859 = vmul.f32 %v843, %v855
  %v860 = vmul.f32 %v844, %v855
  %v861 = vmul.f32 %v845, %v855
  %v862 = vmul.f32 %v846, %v855
  %v863 = vmul.f32 %v847, %v855
  %v864 = vmul.f32 %v848, %v855
  %v865 = vmul.f32 %v849, %v855
  %v866 = vmul.f32 %v850, %v855
  %v867 = vmul.f32 %v851, %v855
  %v868 = vmul.f32 %v852, %v855
  %v869 = vmul.f32 %v853, %v855
  %v870 = vadd.f32 %v825, %v856
  %v871 = vadd.f32 %v826, %v857
  %v872 = vadd.f32 %v827, %v858
  %v873 = vadd.f32 %v828, %v859
  %v874 = vadd.f32 %v829, %v860
  %v875 = vadd.f32 %v830, %v861
  %v876 = vadd.f32 %v831, %v862
  %v877 = vadd.f32 %v832, %v863
  %v878 = vadd.f32 %v833, %v864
  %v879 = vadd.f32 %v834, %v865
  %v880 = vadd.f32 %v835, %v866
  %v881 = vadd.f32 %v836, %v867
  %v882 = vadd.f32 %v837, %v868
  %v883 = vadd.f32 %v838, %v869
  %v884 = vld [vmem:[%s839 + $0x1] sm:$0x7f]
  %v885 = vld [vmem:[%s839 + $0x11] sm:$0x7f]
  %v886 = vld [vmem:[%s839 + $0x21] sm:$0x7f]
  %v887 = vld [vmem:[%s839 + $0x31] sm:$0x7f]
  %v888 = vld [vmem:[%s839 + $0x41] sm:$0x7f]
  %v889 = vld [vmem:[%s839 + $0x51] sm:$0x7f]
  %v890 = vld [vmem:[%s839 + $0x61] sm:$0x7f]
  %v891 = vld [vmem:[%s839 + $0xa1] sm:$0x7f]
  %v892 = vld [vmem:[%s839 + $0xb1] sm:$0x7f]
  %v893 = vld [vmem:[%s839 + $0xc1] sm:$0x7f]
  %v894 = vld [vmem:[%s839 + $0xd1] sm:$0x7f]
  %v895 = vld [vmem:[%s839 + $0xe1] sm:$0x7f]
  %v896 = vld [vmem:[%s839 + $0xf1] sm:$0x7f]
  %v897 = vld [vmem:[%s839 + $0x101] sm:$0x7f]
  %v898 = vld [vmem:[%s3 + $0xd] sm:$0x1]
  %v899 = vperm.slane %v898, 0
  %v900 = vmul.f32 %v884, %v899
  %v901 = vmul.f32 %v885, %v899
  %v902 = vmul.f32 %v886, %v899
  %v903 = vmul.f32 %v887, %v899
  %v904 = vmul.f32 %v888, %v899
  %v905 = vmul.f32 %v889, %v899
  %v906 = vmul.f32 %v890, %v899
  %v907 = vmul.f32 %v891, %v899
  %v908 = vmul.f32 %v892, %v899
  %v909 = vmul.f32 %v893, %v899
  %v910 = vmul.f32 %v894, %v899
  %v911 = vmul.f32 %v895, %v899
  %v912 = vmul.f32 %v896, %v899
  %v913 = vmul.f32 %v897, %v899
  %v914 = vadd.f32 %v870, %v900
  %v915 = vadd.f32 %v871, %v901
  %v916 = vadd.f32 %v872, %v902
  %v917 = vadd.f32 %v873, %v903
  %v918 = vadd.f32 %v874, %v904
  %v919 = vadd.f32 %v875, %v905
  %v920 = vadd.f32 %v876, %v906
  %v921 = vadd.f32 %v877, %v907
  %v922 = vadd.f32 %v878, %v908
  %v923 = vadd.f32 %v879, %v909
  %v924 = vadd.f32 %v880, %v910
  %v925 = vadd.f32 %v881, %v911
  %v926 = vadd.f32 %v882, %v912
  %v927 = vadd.f32 %v883, %v913
  %v928 = vld [vmem:[%s839 + $0x2] sm:$0x7f]
  %v929 = vld [vmem:[%s839 + $0x12] sm:$0x7f]
  %v930 = vld [vmem:[%s839 + $0x22] sm:$0x7f]
  %v931 = vld [vmem:[%s839 + $0x32] sm:$0x7f]
  %v932 = vld [vmem:[%s839 + $0x42] sm:$0x7f]
  %v933 = vld [vmem:[%s839 + $0x52] sm:$0x7f]
  %v934 = vld [vmem:[%s839 + $0x62] sm:$0x7f]
  %v935 = vld [vmem:[%s839 + $0xa2] sm:$0x7f]
  %v936 = vld [vmem:[%s839 + $0xb2] sm:$0x7f]
  %v937 = vld [vmem:[%s839 + $0xc2] sm:$0x7f]
  %v938 = vld [vmem:[%s839 + $0xd2] sm:$0x7f]
  %v939 = vld [vmem:[%s839 + $0xe2] sm:$0x7f]
  %v940 = vld [vmem:[%s839 + $0xf2] sm:$0x7f]
  %v941 = vld [vmem:[%s839 + $0x102] sm:$0x7f]
  %v942 = vld [vmem:[%s3 + $0xe] sm:$0x1]
  %v943 = vperm.slane %v942, 0
  %v944 = vmul.f32 %v928, %v943
  %v945 = vmul.f32 %v929, %v943
  %v946 = vmul.f32 %v930, %v943
  %v947 = vmul.f32 %v931, %v943
  %v948 = vmul.f32 %v932, %v943
  %v949 = vmul.f32 %v933, %v943
  %v950 = vmul.f32 %v934, %v943
  %v951 = vmul.f32 %v935, %v943
  %v952 = vmul.f32 %v936, %v943
  %v953 = vmul.f32 %v937, %v943
  %v954 = vmul.f32 %v938, %v943
  %v955 = vmul.f32 %v939, %v943
  %v956 = vmul.f32 %v940, %v943
  %v957 = vmul.f32 %v941, %v943
  %v958 = vadd.f32 %v914, %v944
  %v959 = vadd.f32 %v915, %v945
  %v960 = vadd.f32 %v916, %v946
  %v961 = vadd.f32 %v917, %v947
  %v962 = vadd.f32 %v918, %v948
  %v963 = vadd.f32 %v919, %v949
  %v964 = vadd.f32 %v920, %v950
  %v965 = vadd.f32 %v921, %v951
  %v966 = vadd.f32 %v922, %v952
  %v967 = vadd.f32 %v923, %v953
  %v968 = vadd.f32 %v924, %v954
  %v969 = vadd.f32 %v925, %v955
  %v970 = vadd.f32 %v926, %v956
  %v971 = vadd.f32 %v927, %v957
  %v972 = vld [vmem:[%s839 + $0x3] sm:$0x7f]
  %v973 = vld [vmem:[%s839 + $0x13] sm:$0x7f]
  %v974 = vld [vmem:[%s839 + $0x23] sm:$0x7f]
  %v975 = vld [vmem:[%s839 + $0x33] sm:$0x7f]
  %v976 = vld [vmem:[%s839 + $0x43] sm:$0x7f]
  %v977 = vld [vmem:[%s839 + $0x53] sm:$0x7f]
  %v978 = vld [vmem:[%s839 + $0x63] sm:$0x7f]
  %v979 = vld [vmem:[%s839 + $0xa3] sm:$0x7f]
  %v980 = vld [vmem:[%s839 + $0xb3] sm:$0x7f]
  %v981 = vld [vmem:[%s839 + $0xc3] sm:$0x7f]
  %v982 = vld [vmem:[%s839 + $0xd3] sm:$0x7f]
  %v983 = vld [vmem:[%s839 + $0xe3] sm:$0x7f]
  %v984 = vld [vmem:[%s839 + $0xf3] sm:$0x7f]
  %v985 = vld [vmem:[%s839 + $0x103] sm:$0x7f]
  %v986 = vld [vmem:[%s3 + $0xf] sm:$0x1]
  %v987 = vperm.slane %v986, 0
  %v988 = vmul.f32 %v972, %v987
  %v989 = vmul.f32 %v973, %v987
  %v990 = vmul.f32 %v974, %v987
  %v991 = vmul.f32 %v975, %v987
  %v992 = vmul.f32 %v976, %v987
  %v993 = vmul.f32 %v977, %v987
  %v994 = vmul.f32 %v978, %v987
  %v995 = vmul.f32 %v979, %v987
  %v996 = vmul.f32 %v980, %v987
  %v997 = vmul.f32 %v981, %v987
  %v998 = vmul.f32 %v982, %v987
  %v999 = vmul.f32 %v983, %v987
  %v1000 = vmul.f32 %v984, %v987
  %v1001 = vmul.f32 %v985, %v987
  %v1002 = vadd.f32 %v958, %v988
  %v1003 = vadd.f32 %v959, %v989
  %v1004 = vadd.f32 %v960, %v990
  %v1005 = vadd.f32 %v961, %v991
  %v1006 = vadd.f32 %v962, %v992
  %v1007 = vadd.f32 %v963, %v993
  %v1008 = vadd.f32 %v964, %v994
  %v1009 = vadd.f32 %v965, %v995
  %v1010 = vadd.f32 %v966, %v996
  %v1011 = vadd.f32 %v967, %v997
  %v1012 = vadd.f32 %v968, %v998
  %v1013 = vadd.f32 %v969, %v999
  %v1014 = vadd.f32 %v970, %v1000
  %v1015 = vadd.f32 %v971, %v1001
  %vm1016 = vcmask 522240
  %v1017 = vsel %vm1016, %v1002, 0.0
  %1018 = vadd.xlane.f32.xlu0 %v1017
  %v1019 = vpop.xlane.xlu0 %1018
  %v1020 = vsel %vm1016, %v1003, 0.0
  %1021 = vadd.xlane.f32.xlu0 %v1020
  %v1022 = vpop.xlane.xlu0 %1021
  %v1023 = vsel %vm1016, %v1004, 0.0
  %1024 = vadd.xlane.f32.xlu0 %v1023
  %v1025 = vpop.xlane.xlu0 %1024
  %v1026 = vsel %vm1016, %v1005, 0.0
  %1027 = vadd.xlane.f32.xlu0 %v1026
  %v1028 = vpop.xlane.xlu0 %1027
  %v1029 = vsel %vm1016, %v1006, 0.0
  %1030 = vadd.xlane.f32.xlu0 %v1029
  %v1031 = vpop.xlane.xlu0 %1030
  %v1032 = vsel %vm1016, %v1007, 0.0
  %1033 = vadd.xlane.f32.xlu0 %v1032
  %v1034 = vpop.xlane.xlu0 %1033
  %v1035 = vsel %vm1016, %v1008, 0.0
  %1036 = vadd.xlane.f32.xlu0 %v1035
  %v1037 = vpop.xlane.xlu0 %1036
  %v1038 = vsel %vm1016, %v1009, 0.0
  %1039 = vadd.xlane.f32.xlu0 %v1038
  %v1040 = vpop.xlane.xlu0 %1039
  %v1041 = vsel %vm1016, %v1010, 0.0
  %1042 = vadd.xlane.f32.xlu0 %v1041
  %v1043 = vpop.xlane.xlu0 %1042
  %v1044 = vsel %vm1016, %v1011, 0.0
  %1045 = vadd.xlane.f32.xlu0 %v1044
  %v1046 = vpop.xlane.xlu0 %1045
  %v1047 = vsel %vm1016, %v1012, 0.0
  %1048 = vadd.xlane.f32.xlu0 %v1047
  %v1049 = vpop.xlane.xlu0 %1048
  %v1050 = vsel %vm1016, %v1013, 0.0
  %1051 = vadd.xlane.f32.xlu0 %v1050
  %v1052 = vpop.xlane.xlu0 %1051
  %v1053 = vsel %vm1016, %v1014, 0.0
  %1054 = vadd.xlane.f32.xlu0 %v1053
  %v1055 = vpop.xlane.xlu0 %1054
  %v1056 = vsel %vm1016, %v1015, 0.0
  %1057 = vadd.xlane.f32.xlu0 %v1056
  %v1058 = vpop.xlane.xlu0 %1057
  %v1059 = vld [vmem:[#allocation3] sm:$0x1]
  %v1061 = vperm.slane %v1059, 0
  %1062 = vset.pattern.permute.xlu0 0
  %1063 = vperm.xlu0 %1062, %v1061
  %v1064 = vpop.permute.xlu0 %1063
  %v1066 = vadd.f32 %v1019, %v1064
  %v1067 = vadd.f32 %v1022, %v1064
  %v1068 = vadd.f32 %v1025, %v1064
  %v1069 = vadd.f32 %v1028, %v1064
  %v1070 = vadd.f32 %v1031, %v1064
  %v1071 = vadd.f32 %v1034, %v1064
  %v1072 = vadd.f32 %v1037, %v1064
  %v1073 = vadd.f32 %v1040, %v1064
  %v1074 = vadd.f32 %v1043, %v1064
  %v1075 = vadd.f32 %v1046, %v1064
  %v1076 = vadd.f32 %v1049, %v1064
  %v1077 = vadd.f32 %v1052, %v1064
  %v1078 = vadd.f32 %v1055, %v1064
  %v1079 = vadd.f32 %v1058, %v1064
  %v1080 = vsub.f32 0.0, %v1066
  %v1081 = vsub.f32 0.0, %v1067
  %v1082 = vsub.f32 0.0, %v1068
  %v1083 = vsub.f32 0.0, %v1069
  %v1084 = vsub.f32 0.0, %v1070
  %v1085 = vsub.f32 0.0, %v1071
  %v1086 = vsub.f32 0.0, %v1072
  %v1087 = vsub.f32 0.0, %v1073
  %v1088 = vsub.f32 0.0, %v1074
  %v1089 = vsub.f32 0.0, %v1075
  %v1090 = vsub.f32 0.0, %v1076
  %v1091 = vsub.f32 0.0, %v1077
  %v1092 = vsub.f32 0.0, %v1078
  %v1093 = vsub.f32 0.0, %v1079
  %v1094 = vmul.f32 %v1080, 1.442695
  %v1095 = vpow.pop %v1094
  %v1096 = vmul.f32 %v1081, 1.442695
  %v1097 = vpow.pop %v1096
  %v1098 = vmul.f32 %v1082, 1.442695
  %v1099 = vpow.pop %v1098
  %v1100 = vmul.f32 %v1083, 1.442695
  %v1101 = vpow.pop %v1100
  %v1102 = vmul.f32 %v1084, 1.442695
  %v1103 = vpow.pop %v1102
  %v1104 = vmul.f32 %v1085, 1.442695
  %v1105 = vpow.pop %v1104
  %v1106 = vmul.f32 %v1086, 1.442695
  %v1107 = vpow.pop %v1106
  %v1108 = vmul.f32 %v1087, 1.442695
  %v1109 = vpow.pop %v1108
  %v1110 = vmul.f32 %v1088, 1.442695
  %v1111 = vpow.pop %v1110
  %v1112 = vmul.f32 %v1089, 1.442695
  %v1113 = vpow.pop %v1112
  %v1114 = vmul.f32 %v1090, 1.442695
  %v1115 = vpow.pop %v1114
  %v1116 = vmul.f32 %v1091, 1.442695
  %v1117 = vpow.pop %v1116
  %v1118 = vmul.f32 %v1092, 1.442695
  %v1119 = vpow.pop %v1118
  %v1120 = vmul.f32 %v1093, 1.442695
  %v1121 = vpow.pop %v1120
  %v1122 = vadd.f32 %v1095, 1.0
  %v1123 = vadd.f32 %v1097, 1.0
  %v1124 = vadd.f32 %v1099, 1.0
  %v1125 = vadd.f32 %v1101, 1.0
  %v1126 = vadd.f32 %v1103, 1.0
  %v1127 = vadd.f32 %v1105, 1.0
  %v1128 = vadd.f32 %v1107, 1.0
  %v1129 = vadd.f32 %v1109, 1.0
  %v1130 = vadd.f32 %v1111, 1.0
  %v1131 = vadd.f32 %v1113, 1.0
  %v1132 = vadd.f32 %v1115, 1.0
  %v1133 = vadd.f32 %v1117, 1.0
  %v1134 = vadd.f32 %v1119, 1.0
  %v1135 = vadd.f32 %v1121, 1.0
  %v1136 = vrcp.pop %v1122
  %v1137 = vrcp.pop %v1123
  %v1138 = vrcp.pop %v1124
  %v1139 = vrcp.pop %v1125
  %v1140 = vrcp.pop %v1126
  %v1141 = vrcp.pop %v1127
  %v1142 = vrcp.pop %v1128
  %v1143 = vrcp.pop %v1129
  %v1144 = vrcp.pop %v1130
  %v1145 = vrcp.pop %v1131
  %v1146 = vrcp.pop %v1132
  %v1147 = vrcp.pop %v1133
  %v1148 = vrcp.pop %v1134
  %v1149 = vrcp.pop %v1135
  %v1164 = vlaneseq
  %v1165 = vand.u32 %v1164, 127
  %v1166 = vperm.slane %v1136, %v1165
  %v1167 = vperm.slane %v1137, %v1165
  %v1168 = vperm.slane %v1138, %v1165
  %v1169 = vperm.slane %v1139, %v1165
  %v1170 = vperm.slane %v1140, %v1165
  %v1171 = vperm.slane %v1141, %v1165
  %v1172 = vperm.slane %v1142, %v1165
  %v1173 = vperm.slane %v1143, %v1165
  %v1174 = vperm.slane %v1144, %v1165
  %v1175 = vperm.slane %v1145, %v1165
  %v1176 = vperm.slane %v1146, %v1165
  %v1177 = vperm.slane %v1147, %v1165
  %v1178 = vperm.slane %v1148, %v1165
  %v1179 = vperm.slane %v1149, %v1165
  %vm1180 = vcmask 1041409
  %v1181 = vsel %vm1180, %v1167, %v1166
  %vm1182 = vcmask 1042434
  %v1183 = vsel %vm1182, %v1168, %v1181
  %vm1184 = vcmask 1043459
  %v1185 = vsel %vm1184, %v1169, %v1183
  %vm1186 = vcmask 1044484
  %v1187 = vsel %vm1186, %v1170, %v1185
  %vm1188 = vcmask 1045509
  %v1189 = vsel %vm1188, %v1171, %v1187
  %vm1190 = vcmask 1046534
  %v1191 = vsel %vm1190, %v1172, %v1189
  %v1192 = vsel %vm1180, %v1174, %v1173
  %v1193 = vsel %vm1182, %v1175, %v1192
  %v1194 = vsel %vm1184, %v1176, %v1193
  %v1195 = vsel %vm1186, %v1177, %v1194
  %v1196 = vsel %vm1188, %v1178, %v1195
  %v1197 = vsel %vm1190, %v1179, %v1196
  %vm1200 = vcmask 55296
  %1201 = vst.msk [vmem:[%s5] sm:$0x7f] %vm1200, %v1191
  %1202 = vst.msk [vmem:[%s5 + $0x8] sm:$0x7f] %vm1200, %v1197
  // Predicated region
  $region22: #{discriminator_forward.1} parent=0 // pred_check
    _
  $region23: #{discriminator_forward.1} parent=0 // pred_check_branch
    %1204 = sbr.rel (0) target = $region25
  $region24: #{discriminator_forward.1} parent=0 // pred_region
    _
  $region25: #{discriminator_forward.1} parent=0 // pred_fallthru
    _
  // Predicated region
  $region26: #{discriminator_forward.1} parent=0 // pred_check
    _
  $region27: #{discriminator_forward.1} parent=0 // pred_check_branch
    %1206 = sbr.rel (0) target = $region29
  $region28: #{discriminator_forward.1} parent=0 // pred_region
    _
  $region29: #{discriminator_forward.1} parent=0 // pred_fallthru
    _

</llo_original>
